<compile_context>
chip_gen: v6e
topology: v6e:2x2x1
jax: 0.10.0
libtpu: 0.0.40
codegen_flags: <defaults>
</compile_context>

<pallas_src>
import functools

import jax
import jax.numpy as jnp
from jax.experimental import pallas as pl
from jax.experimental.pallas import tpu as pltpu


# ------------------------------ Pallas kernel ------------------------------ #

def make_fused_kernel(num_layers, num_directions, T, B_pad, H):
    """Builds the fused kernel for static (layers, directions, T, B_pad, H).

    Kernel ref order:
      x_ref (T*B_pad, D_in),
      then per layer, per direction: wih_T (D_in_l, 4H), whh_T (H, 4H), b (1, 4H),
      then wfc_T (H*nd, O), bfc (1, O),
      then out_ref (B_pad, O),
      then scratch: xp_ref (T*B_pad, nd*4H), hs_ref (T*B_pad, nd*H).
    """
    G = 4 * H

    def kernel(*refs):
        x_ref = refs[0]
        idx = 1
        layer_params = []
        for _ in range(num_layers):
            dirs = []
            for _ in range(num_directions):
                dirs.append((refs[idx], refs[idx + 1], refs[idx + 2]))
                idx += 3
            layer_params.append(dirs)
        wfc_ref, bfc_ref = refs[idx], refs[idx + 1]
        out_ref = refs[idx + 2]
        xp_ref = refs[idx + 3]          # (T*B_pad, nd*4H) VMEM scratch
        hs_ref = refs[idx + 4]          # (T*B_pad, nd*H)  VMEM scratch

        # Hoisted (outside all loops): lane mask for the g-gate range and the
        # per-lane tanh pre-scale (0.5 for i/f/o -> sigmoid identity, 1.0 for g).
        lane = jax.lax.broadcasted_iota(jnp.int32, (B_pad, G), 1)
        is_g = (lane >= 2 * H) & (lane < 3 * H)
        scale = jnp.where(is_g, 1.0, 0.5).astype(jnp.float32)

        for layer in range(num_layers):
            # ---- input projections: one GEMM per direction, off the serial path
            if layer == 0:
                inp = x_ref[...].astype(jnp.float32)          # (T*B_pad, D_in)
            else:
                inp = hs_ref[...]                             # (T*B_pad, nd*H)
            for d in range(num_directions):
                wih_ref, _, b_ref = layer_params[layer][d]
                xp = jnp.dot(inp, wih_ref[...],
                             preferred_element_type=jnp.float32)
                xp_ref[pl.ds(0, T * B_pad), pl.ds(d * G, G)] = xp + b_ref[...]

            # ---- serial recurrences (the only true dependency chain)
            for d in range(num_directions):
                _, whh_ref, _ = layer_params[layer][d]
                w_hh = whh_ref[...]                           # (H, 4H), one load
                h = jnp.zeros((B_pad, H), jnp.float32)
                c = jnp.zeros((B_pad, H), jnp.float32)
                for s in range(T):
                    t = s if d == 0 else (T - 1 - s)          # original timestep
                    row = t * B_pad                           # static, 8-aligned
                    gates = (xp_ref[pl.ds(row, B_pad), pl.ds(d * G, G)]
                             + jnp.dot(h, w_hh,
                                       preferred_element_type=jnp.float32))
                    # Single EUP push for all four gates:
                    #   i/f/o lanes: sigmoid(x) = 0.5*(tanh(x/2)+1)
                    #   g lanes:     tanh(x)
                    tg = jnp.tanh(gates * scale)
                    act = jnp.where(is_g, tg, 0.5 * (tg + 1.0))
                    i_ = act[:, 0:H]
                    f_ = act[:, H:2 * H]
                    g_ = act[:, 2 * H:3 * H]
                    o_ = act[:, 3 * H:4 * H]
                    c = f_ * c + i_ * g_
                    h = o_ * jnp.tanh(c)                      # second EUP push
                    hs_ref[pl.ds(row, B_pad), pl.ds(d * H, H)] = h

        # ---- head: ELU on the last timestep (h bounded in [-1,1]) + Linear
        h_last = hs_ref[pl.ds((T - 1) * B_pad, B_pad), :]     # (B_pad, nd*H)
        e = jnp.where(h_last > 0, h_last, jnp.exp(h_last) - 1.0)   # ELU, alpha=1
        out_ref[...] = (
            jnp.dot(e, wfc_ref[...], preferred_element_type=jnp.float32)
            + bfc_ref[...]
        ).astype(out_ref.dtype)

    return kernel


# ------------------------------ JAX wrappers -------------------------------- #

def prepare_kernel_params(raw_lstm, raw_fc):
    """Pre-transpose PyTorch-layout parameters once, outside jit.

    raw_lstm: tuple over layers of tuple over directions of
              (W_ih (4H, D_in), W_hh (4H, H), b_ih (4H,), b_hh (4H,))
    raw_fc:   (W_fc (O, H*nd), b_fc (O,))
    """
    lstm_p = []
    for layer_dirs in raw_lstm:
        dirs = []
        for (wih, whh, b_ih, b_hh) in layer_dirs:
            wih_t = jnp.transpose(wih).astype(jnp.float32)          # (D_in, 4H)
            whh_t = jnp.transpose(whh).astype(jnp.float32)          # (H, 4H)
            b = (b_ih + b_hh).reshape(1, -1).astype(jnp.float32)    # (1, 4H)
            dirs.append((wih_t, whh_t, b))
        lstm_p.append(tuple(dirs))
    w_fc, b_fc = raw_fc
    return tuple(lstm_p), (jnp.transpose(w_fc).astype(jnp.float32),
                           b_fc.reshape(1, -1).astype(jnp.float32))


@functools.partial(jax.jit, static_argnames=("num_layers", "num_directions"))
def lstm2_forward(x, kernel_params, *, num_layers, num_directions):
    """x: (B, T, D) batch-first, like the PyTorch module. Returns (B, O)."""
    lstm_p, (wfc_t, bfc) = kernel_params
    B, T, D = x.shape
    H = lstm_p[0][0][1].shape[0]              # whh_t is (H, 4H)
    O = wfc_t.shape[1]
    B_pad = max(8, ((B + 7) // 8) * 8)        # fill all 8 f32 sublanes

    xf = x.astype(jnp.float32)
    if B_pad != B:
        xf = jnp.pad(xf, ((0, B_pad - B), (0, 0), (0, 0)))
    # Time-major slab: row index = t * B_pad + b.
    x_flat = jnp.transpose(xf, (1, 0, 2)).reshape(T * B_pad, D)

    flat_inputs = [x_flat]
    for layer in range(num_layers):
        for d in range(num_directions):
            flat_inputs.extend(lstm_p[layer][d])
    flat_inputs.extend([wfc_t, bfc])

    kernel = make_fused_kernel(num_layers, num_directions, T, B_pad, H)
    # Single grid-less launch; whole working set is a few KiB, comfortably in
    # VMEM with default whole-array BlockSpecs.
    out_pad = pl.pallas_call(
        kernel,
        out_shape=jax.ShapeDtypeStruct((B_pad, O), jnp.float32),
        scratch_shapes=[
            pltpu.VMEM((T * B_pad, num_directions * 4 * H), jnp.float32),  # xp
            pltpu.VMEM((T * B_pad, num_directions * H), jnp.float32),      # hs
        ],
    )(*flat_inputs)
    return out_pad[:B]


# --------------------------- pure-JAX reference ----------------------------- #

def ref_lstm_layer(x_tbd, wih, whh, b_ih, b_hh):
    B = x_tbd.shape[1]
    H = whh.shape[1]

    def step(carry, xt):
        h, c = carry
        g = xt @ wih.T + h @ whh.T + b_ih + b_hh
        i, f, gg, o = jnp.split(g, 4, axis=-1)
        i, f, o = jax.nn.sigmoid(i), jax.nn.sigmoid(f), jax.nn.sigmoid(o)
        gg = jnp.tanh(gg)
        c = f * c + i * gg
        h = o * jnp.tanh(c)
        return (h, c), h

    init = (jnp.zeros((B, H), jnp.float32), jnp.zeros((B, H), jnp.float32))
    _, ys = jax.lax.scan(step, init, x_tbd)
    return ys


def ref_forward(x, raw_lstm, raw_fc, num_layers, num_directions):
    x_t = jnp.transpose(x, (1, 0, 2)).astype(jnp.float32)
    for layer in range(num_layers):
        outs = []
        for d in range(num_directions):
            wih, whh, b_ih, b_hh = raw_lstm[layer][d]
            inp = x_t if d == 0 else jnp.flip(x_t, axis=0)
            out = ref_lstm_layer(inp, wih, whh, b_ih, b_hh)
            if d == 1:
                out = jnp.flip(out, axis=0)
            outs.append(out)
        x_t = outs[0] if num_directions == 1 else jnp.concatenate(outs, axis=-1)
    h = x_t[-1]
    e = jnp.where(h > 0, h, jnp.exp(h) - 1.0)
    w_fc, b_fc = raw_fc
    return e @ w_fc.T + b_fc


# --------------------------------- main ------------------------------------- #

if __name__ == "__main__":
    INPUT_SIZE = 16
    HIDDEN_SIZE = 32
    NUM_LAYERS = 2
    OUTPUT_SIZE = 4
    BIDIRECTIONAL = False           # module default
    NUM_DIRECTIONS = 2 if BIDIRECTIONAL else 1
    B, T = 2, 8

    key = jax.random.PRNGKey(0)
    k = 1.0 / jnp.sqrt(HIDDEN_SIZE)

    # PyTorch-layout parameters, uniform(-1/sqrt(H), 1/sqrt(H)).
    raw_lstm = []
    for layer in range(NUM_LAYERS):
        d_in = INPUT_SIZE if layer == 0 else HIDDEN_SIZE * NUM_DIRECTIONS
        dirs = []
        for d in range(NUM_DIRECTIONS):
            key, k1, k2, k3, k4 = jax.random.split(key, 5)
            wih = jax.random.uniform(k1, (4 * HIDDEN_SIZE, d_in), jnp.float32, -k, k)
            whh = jax.random.uniform(k2, (4 * HIDDEN_SIZE, HIDDEN_SIZE), jnp.float32, -k, k)
            b_ih = jax.random.uniform(k3, (4 * HIDDEN_SIZE,), jnp.float32, -k, k)
            b_hh = jax.random.uniform(k4, (4 * HIDDEN_SIZE,), jnp.float32, -k, k)
            dirs.append((wih, whh, b_ih, b_hh))
        raw_lstm.append(tuple(dirs))
    raw_lstm = tuple(raw_lstm)

    key, kf1, kf2, kx = jax.random.split(key, 4)
    kfc = 1.0 / jnp.sqrt(HIDDEN_SIZE * NUM_DIRECTIONS)
    w_fc = jax.random.uniform(kf1, (OUTPUT_SIZE, HIDDEN_SIZE * NUM_DIRECTIONS),
                              jnp.float32, -kfc, kfc)
    b_fc = jax.random.uniform(kf2, (OUTPUT_SIZE,), jnp.float32, -kfc, kfc)
    raw_fc = (w_fc, b_fc)

    # Input: (B, T, input_size), batch-first as in the PyTorch module.
    x = jax.random.normal(kx, (B, T, INPUT_SIZE), jnp.float32)

    kernel_params = prepare_kernel_params(raw_lstm, raw_fc)
    out = lstm2_forward(x, kernel_params,
                        num_layers=NUM_LAYERS, num_directions=NUM_DIRECTIONS)
    out = jax.block_until_ready(out)

    ref = ref_forward(x, raw_lstm, raw_fc, NUM_LAYERS, NUM_DIRECTIONS)
    assert out.shape == (B, OUTPUT_SIZE)
    assert jnp.allclose(out, ref, atol=1e-4, rtol=1e-4), (out, ref)

    print("KERNEL_OK")
</pallas_src>

<mosaic_0001>
module attributes {stable_mosaic.version = 11 : i64} {
  func.func @kernel(%arg0: memref<64x16xf32, #tpu.memory_space<vmem>>, %arg1: memref<16x128xf32, #tpu.memory_space<vmem>>, %arg2: memref<32x128xf32, #tpu.memory_space<vmem>>, %arg3: memref<1x128xf32, #tpu.memory_space<vmem>>, %arg4: memref<32x128xf32, #tpu.memory_space<vmem>>, %arg5: memref<32x128xf32, #tpu.memory_space<vmem>>, %arg6: memref<1x128xf32, #tpu.memory_space<vmem>>, %arg7: memref<32x4xf32, #tpu.memory_space<vmem>>, %arg8: memref<1x4xf32, #tpu.memory_space<vmem>>, %arg9: memref<8x4xf32, #tpu.memory_space<vmem>>, %arg10: memref<64x128xf32, #tpu.memory_space<vmem>>, %arg11: memref<64x32xf32, #tpu.memory_space<vmem>>) attributes {dimension_semantics = [], scalar_prefetch = 0 : i64, scratch_operands = 2 : i64, tpu.core_type = #tpu.core_type<tc>} {
    %0 = tpu.iota {dimensions = array<i32: 1>} : vector<8x128xi32>
    %c64_i32 = arith.constant 64 : i32
    %1 = vector.broadcast %c64_i32 : i32 to vector<8x128xi32>
    %2 = arith.cmpi sge, %0, %1 : vector<8x128xi32>
    %c96_i32 = arith.constant 96 : i32
    %3 = vector.broadcast %c96_i32 : i32 to vector<8x128xi32>
    %4 = arith.cmpi slt, %0, %3 : vector<8x128xi32>
    %5 = arith.andi %2, %4 : vector<8x128xi1>
    %cst = arith.constant 1.000000e+00 : f32
    %cst_0 = arith.constant 5.000000e-01 : f32
    %6 = vector.broadcast %cst : f32 to vector<8x128xf32>
    %7 = vector.broadcast %cst_0 : f32 to vector<8x128xf32>
    %8 = arith.select %5, %6, %7 : vector<8x128xi1>, vector<8x128xf32>
    %c0 = arith.constant 0 : index
    %c0_1 = arith.constant 0 : index
    %9 = vector.load %arg0[%c0, %c0_1] : memref<64x16xf32, #tpu.memory_space<vmem>>, vector<64x16xf32>
    %c0_2 = arith.constant 0 : index
    %c0_3 = arith.constant 0 : index
    %10 = vector.load %arg1[%c0_2, %c0_3] : memref<16x128xf32, #tpu.memory_space<vmem>>, vector<16x128xf32>
    %cst_4 = arith.constant dense<0.000000e+00> : vector<64x128xf32>
    %11 = tpu.matmul %9, %10, %cst_4 {dimension_numbers = #tpu.dot_dimension_numbers<[1], [0], [0], [1], [0, 0, 1, 1], [], []>} : vector<64x16xf32>, vector<16x128xf32>, vector<64x128xf32> -> vector<64x128xf32>
    %c0_5 = arith.constant 0 : index
    %c0_6 = arith.constant 0 : index
    %12 = vector.load %arg3[%c0_5, %c0_6] : memref<1x128xf32, #tpu.memory_space<vmem>>, vector<1x128xf32>
    %13 = vector.broadcast %12 : vector<1x128xf32> to vector<64x128xf32>
    %14 = arith.addf %11, %13 : vector<64x128xf32>
    %c0_7 = arith.constant 0 : index
    %c0_8 = arith.constant 0 : index
    %15 = vector.load %arg10[%c0_7, %c0_8] : memref<64x128xf32, #tpu.memory_space<vmem>>, vector<64x128xf32>
    tpu.vector_store %arg10[%c0_7, %c0_8], %14 {strides = array<i32>} : memref<64x128xf32, #tpu.memory_space<vmem>>, vector<64x128xf32>,
    %c0_9 = arith.constant 0 : index
    %c0_10 = arith.constant 0 : index
    %16 = vector.load %arg2[%c0_9, %c0_10] : memref<32x128xf32, #tpu.memory_space<vmem>>, vector<32x128xf32>
    %cst_11 = arith.constant 0.000000e+00 : f32
    %17 = vector.broadcast %cst_11 : f32 to vector<8x32xf32>
    %cst_12 = arith.constant 0.000000e+00 : f32
    %18 = vector.broadcast %cst_12 : f32 to vector<8x32xf32>
    %c0_13 = arith.constant 0 : index
    %c0_14 = arith.constant 0 : index
    %19 = vector.load %arg10[%c0_13, %c0_14] : memref<64x128xf32, #tpu.memory_space<vmem>>, vector<8x128xf32>
    %cst_15 = arith.constant dense<0.000000e+00> : vector<8x128xf32>
    %20 = tpu.matmul %17, %16, %cst_15 {dimension_numbers = #tpu.dot_dimension_numbers<[1], [0], [0], [1], [0, 0, 1, 1], [], []>} : vector<8x32xf32>, vector<32x128xf32>, vector<8x128xf32> -> vector<8x128xf32>
    %21 = arith.addf %19, %20 : vector<8x128xf32>
    %22 = arith.mulf %21, %8 : vector<8x128xf32>
    %23 = math.tanh %22 : vector<8x128xf32>
    %cst_16 = arith.constant 1.000000e+00 : f32
    %24 = vector.broadcast %cst_16 : f32 to vector<8x128xf32>
    %25 = arith.addf %23, %24 : vector<8x128xf32>
    %cst_17 = arith.constant 5.000000e-01 : f32
    %26 = vector.broadcast %cst_17 : f32 to vector<8x128xf32>
    %27 = arith.mulf %26, %25 : vector<8x128xf32>
    %28 = arith.select %5, %23, %27 : vector<8x128xi1>, vector<8x128xf32>
    %29 = vector.extract_strided_slice %28 {offsets = [0, 0], sizes = [8, 32], strides = [1, 1]} : vector<8x128xf32> to vector<8x32xf32>
    %30 = vector.extract_strided_slice %28 {offsets = [0, 32], sizes = [8, 32], strides = [1, 1]} : vector<8x128xf32> to vector<8x32xf32>
    %31 = vector.extract_strided_slice %28 {offsets = [0, 64], sizes = [8, 32], strides = [1, 1]} : vector<8x128xf32> to vector<8x32xf32>
    %32 = vector.extract_strided_slice %28 {offsets = [0, 96], sizes = [8, 32], strides = [1, 1]} : vector<8x128xf32> to vector<8x32xf32>
    %33 = arith.mulf %30, %18 : vector<8x32xf32>
    %34 = arith.mulf %29, %31 : vector<8x32xf32>
    %35 = arith.addf %33, %34 : vector<8x32xf32>
    %36 = math.tanh %35 : vector<8x32xf32>
    %37 = arith.mulf %32, %36 : vector<8x32xf32>
    %c0_18 = arith.constant 0 : index
    %c0_19 = arith.constant 0 : index
    %38 = vector.load %arg11[%c0_18, %c0_19] : memref<64x32xf32, #tpu.memory_space<vmem>>, vector<8x32xf32>
    tpu.vector_store %arg11[%c0_18, %c0_19], %37 {strides = array<i32>} : memref<64x32xf32, #tpu.memory_space<vmem>>, vector<8x32xf32>,
    %c8 = arith.constant 8 : index
    %c0_20 = arith.constant 0 : index
    %39 = vector.load %arg10[%c8, %c0_20] : memref<64x128xf32, #tpu.memory_space<vmem>>, vector<8x128xf32>
    %cst_21 = arith.constant dense<0.000000e+00> : vector<8x128xf32>
    %40 = tpu.matmul %37, %16, %cst_21 {dimension_numbers = #tpu.dot_dimension_numbers<[1], [0], [0], [1], [0, 0, 1, 1], [], []>} : vector<8x32xf32>, vector<32x128xf32>, vector<8x128xf32> -> vector<8x128xf32>
    %41 = arith.addf %39, %40 : vector<8x128xf32>
    %42 = arith.mulf %41, %8 : vector<8x128xf32>
    %43 = math.tanh %42 : vector<8x128xf32>
    %cst_22 = arith.constant 1.000000e+00 : f32
    %44 = vector.broadcast %cst_22 : f32 to vector<8x128xf32>
    %45 = arith.addf %43, %44 : vector<8x128xf32>
    %cst_23 = arith.constant 5.000000e-01 : f32
    %46 = vector.broadcast %cst_23 : f32 to vector<8x128xf32>
    %47 = arith.mulf %46, %45 : vector<8x128xf32>
    %48 = arith.select %5, %43, %47 : vector<8x128xi1>, vector<8x128xf32>
    %49 = vector.extract_strided_slice %48 {offsets = [0, 0], sizes = [8, 32], strides = [1, 1]} : vector<8x128xf32> to vector<8x32xf32>
    %50 = vector.extract_strided_slice %48 {offsets = [0, 32], sizes = [8, 32], strides = [1, 1]} : vector<8x128xf32> to vector<8x32xf32>
    %51 = vector.extract_strided_slice %48 {offsets = [0, 64], sizes = [8, 32], strides = [1, 1]} : vector<8x128xf32> to vector<8x32xf32>
    %52 = vector.extract_strided_slice %48 {offsets = [0, 96], sizes = [8, 32], strides = [1, 1]} : vector<8x128xf32> to vector<8x32xf32>
    %53 = arith.mulf %50, %35 : vector<8x32xf32>
    %54 = arith.mulf %49, %51 : vector<8x32xf32>
    %55 = arith.addf %53, %54 : vector<8x32xf32>
    %56 = math.tanh %55 : vector<8x32xf32>
    %57 = arith.mulf %52, %56 : vector<8x32xf32>
    %c8_24 = arith.constant 8 : index
    %c0_25 = arith.constant 0 : index
    %58 = vector.load %arg11[%c8_24, %c0_25] : memref<64x32xf32, #tpu.memory_space<vmem>>, vector<8x32xf32>
    tpu.vector_store %arg11[%c8_24, %c0_25], %57 {strides = array<i32>} : memref<64x32xf32, #tpu.memory_space<vmem>>, vector<8x32xf32>,
    %c16 = arith.constant 16 : index
    %c0_26 = arith.constant 0 : index
    %59 = vector.load %arg10[%c16, %c0_26] : memref<64x128xf32, #tpu.memory_space<vmem>>, vector<8x128xf32>
    %cst_27 = arith.constant dense<0.000000e+00> : vector<8x128xf32>
    %60 = tpu.matmul %57, %16, %cst_27 {dimension_numbers = #tpu.dot_dimension_numbers<[1], [0], [0], [1], [0, 0, 1, 1], [], []>} : vector<8x32xf32>, vector<32x128xf32>, vector<8x128xf32> -> vector<8x128xf32>
    %61 = arith.addf %59, %60 : vector<8x128xf32>
    %62 = arith.mulf %61, %8 : vector<8x128xf32>
    %63 = math.tanh %62 : vector<8x128xf32>
    %cst_28 = arith.constant 1.000000e+00 : f32
    %64 = vector.broadcast %cst_28 : f32 to vector<8x128xf32>
    %65 = arith.addf %63, %64 : vector<8x128xf32>
    %cst_29 = arith.constant 5.000000e-01 : f32
    %66 = vector.broadcast %cst_29 : f32 to vector<8x128xf32>
    %67 = arith.mulf %66, %65 : vector<8x128xf32>
    %68 = arith.select %5, %63, %67 : vector<8x128xi1>, vector<8x128xf32>
    %69 = vector.extract_strided_slice %68 {offsets = [0, 0], sizes = [8, 32], strides = [1, 1]} : vector<8x128xf32> to vector<8x32xf32>
    %70 = vector.extract_strided_slice %68 {offsets = [0, 32], sizes = [8, 32], strides = [1, 1]} : vector<8x128xf32> to vector<8x32xf32>
    %71 = vector.extract_strided_slice %68 {offsets = [0, 64], sizes = [8, 32], strides = [1, 1]} : vector<8x128xf32> to vector<8x32xf32>
    %72 = vector.extract_strided_slice %68 {offsets = [0, 96], sizes = [8, 32], strides = [1, 1]} : vector<8x128xf32> to vector<8x32xf32>
    %73 = arith.mulf %70, %55 : vector<8x32xf32>
    %74 = arith.mulf %69, %71 : vector<8x32xf32>
    %75 = arith.addf %73, %74 : vector<8x32xf32>
    %76 = math.tanh %75 : vector<8x32xf32>
    %77 = arith.mulf %72, %76 : vector<8x32xf32>
    %c16_30 = arith.constant 16 : index
    %c0_31 = arith.constant 0 : index
    %78 = vector.load %arg11[%c16_30, %c0_31] : memref<64x32xf32, #tpu.memory_space<vmem>>, vector<8x32xf32>
    tpu.vector_store %arg11[%c16_30, %c0_31], %77 {strides = array<i32>} : memref<64x32xf32, #tpu.memory_space<vmem>>, vector<8x32xf32>,
    %c24 = arith.constant 24 : index
    %c0_32 = arith.constant 0 : index
    %79 = vector.load %arg10[%c24, %c0_32] : memref<64x128xf32, #tpu.memory_space<vmem>>, vector<8x128xf32>
    %cst_33 = arith.constant dense<0.000000e+00> : vector<8x128xf32>
    %80 = tpu.matmul %77, %16, %cst_33 {dimension_numbers = #tpu.dot_dimension_numbers<[1], [0], [0], [1], [0, 0, 1, 1], [], []>} : vector<8x32xf32>, vector<32x128xf32>, vector<8x128xf32> -> vector<8x128xf32>
    %81 = arith.addf %79, %80 : vector<8x128xf32>
    %82 = arith.mulf %81, %8 : vector<8x128xf32>
    %83 = math.tanh %82 : vector<8x128xf32>
    %cst_34 = arith.constant 1.000000e+00 : f32
    %84 = vector.broadcast %cst_34 : f32 to vector<8x128xf32>
    %85 = arith.addf %83, %84 : vector<8x128xf32>
    %cst_35 = arith.constant 5.000000e-01 : f32
    %86 = vector.broadcast %cst_35 : f32 to vector<8x128xf32>
    %87 = arith.mulf %86, %85 : vector<8x128xf32>
    %88 = arith.select %5, %83, %87 : vector<8x128xi1>, vector<8x128xf32>
    %89 = vector.extract_strided_slice %88 {offsets = [0, 0], sizes = [8, 32], strides = [1, 1]} : vector<8x128xf32> to vector<8x32xf32>
    %90 = vector.extract_strided_slice %88 {offsets = [0, 32], sizes = [8, 32], strides = [1, 1]} : vector<8x128xf32> to vector<8x32xf32>
    %91 = vector.extract_strided_slice %88 {offsets = [0, 64], sizes = [8, 32], strides = [1, 1]} : vector<8x128xf32> to vector<8x32xf32>
    %92 = vector.extract_strided_slice %88 {offsets = [0, 96], sizes = [8, 32], strides = [1, 1]} : vector<8x128xf32> to vector<8x32xf32>
    %93 = arith.mulf %90, %75 : vector<8x32xf32>
    %94 = arith.mulf %89, %91 : vector<8x32xf32>
    %95 = arith.addf %93, %94 : vector<8x32xf32>
    %96 = math.tanh %95 : vector<8x32xf32>
    %97 = arith.mulf %92, %96 : vector<8x32xf32>
    %c24_36 = arith.constant 24 : index
    %c0_37 = arith.constant 0 : index
    %98 = vector.load %arg11[%c24_36, %c0_37] : memref<64x32xf32, #tpu.memory_space<vmem>>, vector<8x32xf32>
    tpu.vector_store %arg11[%c24_36, %c0_37], %97 {strides = array<i32>} : memref<64x32xf32, #tpu.memory_space<vmem>>, vector<8x32xf32>,
    %c32 = arith.constant 32 : index
    %c0_38 = arith.constant 0 : index
    %99 = vector.load %arg10[%c32, %c0_38] : memref<64x128xf32, #tpu.memory_space<vmem>>, vector<8x128xf32>
    %cst_39 = arith.constant dense<0.000000e+00> : vector<8x128xf32>
    %100 = tpu.matmul %97, %16, %cst_39 {dimension_numbers = #tpu.dot_dimension_numbers<[1], [0], [0], [1], [0, 0, 1, 1], [], []>} : vector<8x32xf32>, vector<32x128xf32>, vector<8x128xf32> -> vector<8x128xf32>
    %101 = arith.addf %99, %100 : vector<8x128xf32>
    %102 = arith.mulf %101, %8 : vector<8x128xf32>
    %103 = math.tanh %102 : vector<8x128xf32>
    %cst_40 = arith.constant 1.000000e+00 : f32
    %104 = vector.broadcast %cst_40 : f32 to vector<8x128xf32>
    %105 = arith.addf %103, %104 : vector<8x128xf32>
    %cst_41 = arith.constant 5.000000e-01 : f32
    %106 = vector.broadcast %cst_41 : f32 to vector<8x128xf32>
    %107 = arith.mulf %106, %105 : vector<8x128xf32>
    %108 = arith.select %5, %103, %107 : vector<8x128xi1>, vector<8x128xf32>
    %109 = vector.extract_strided_slice %108 {offsets = [0, 0], sizes = [8, 32], strides = [1, 1]} : vector<8x128xf32> to vector<8x32xf32>
    %110 = vector.extract_strided_slice %108 {offsets = [0, 32], sizes = [8, 32], strides = [1, 1]} : vector<8x128xf32> to vector<8x32xf32>
    %111 = vector.extract_strided_slice %108 {offsets = [0, 64], sizes = [8, 32], strides = [1, 1]} : vector<8x128xf32> to vector<8x32xf32>
    %112 = vector.extract_strided_slice %108 {offsets = [0, 96], sizes = [8, 32], strides = [1, 1]} : vector<8x128xf32> to vector<8x32xf32>
    %113 = arith.mulf %110, %95 : vector<8x32xf32>
    %114 = arith.mulf %109, %111 : vector<8x32xf32>
    %115 = arith.addf %113, %114 : vector<8x32xf32>
    %116 = math.tanh %115 : vector<8x32xf32>
    %117 = arith.mulf %112, %116 : vector<8x32xf32>
    %c32_42 = arith.constant 32 : index
    %c0_43 = arith.constant 0 : index
    %118 = vector.load %arg11[%c32_42, %c0_43] : memref<64x32xf32, #tpu.memory_space<vmem>>, vector<8x32xf32>
    tpu.vector_store %arg11[%c32_42, %c0_43], %117 {strides = array<i32>} : memref<64x32xf32, #tpu.memory_space<vmem>>, vector<8x32xf32>,
    %c40 = arith.constant 40 : index
    %c0_44 = arith.constant 0 : index
    %119 = vector.load %arg10[%c40, %c0_44] : memref<64x128xf32, #tpu.memory_space<vmem>>, vector<8x128xf32>
    %cst_45 = arith.constant dense<0.000000e+00> : vector<8x128xf32>
    %120 = tpu.matmul %117, %16, %cst_45 {dimension_numbers = #tpu.dot_dimension_numbers<[1], [0], [0], [1], [0, 0, 1, 1], [], []>} : vector<8x32xf32>, vector<32x128xf32>, vector<8x128xf32> -> vector<8x128xf32>
    %121 = arith.addf %119, %120 : vector<8x128xf32>
    %122 = arith.mulf %121, %8 : vector<8x128xf32>
    %123 = math.tanh %122 : vector<8x128xf32>
    %cst_46 = arith.constant 1.000000e+00 : f32
    %124 = vector.broadcast %cst_46 : f32 to vector<8x128xf32>
    %125 = arith.addf %123, %124 : vector<8x128xf32>
    %cst_47 = arith.constant 5.000000e-01 : f32
    %126 = vector.broadcast %cst_47 : f32 to vector<8x128xf32>
    %127 = arith.mulf %126, %125 : vector<8x128xf32>
    %128 = arith.select %5, %123, %127 : vector<8x128xi1>, vector<8x128xf32>
    %129 = vector.extract_strided_slice %128 {offsets = [0, 0], sizes = [8, 32], strides = [1, 1]} : vector<8x128xf32> to vector<8x32xf32>
    %130 = vector.extract_strided_slice %128 {offsets = [0, 32], sizes = [8, 32], strides = [1, 1]} : vector<8x128xf32> to vector<8x32xf32>
    %131 = vector.extract_strided_slice %128 {offsets = [0, 64], sizes = [8, 32], strides = [1, 1]} : vector<8x128xf32> to vector<8x32xf32>
    %132 = vector.extract_strided_slice %128 {offsets = [0, 96], sizes = [8, 32], strides = [1, 1]} : vector<8x128xf32> to vector<8x32xf32>
    %133 = arith.mulf %130, %115 : vector<8x32xf32>
    %134 = arith.mulf %129, %131 : vector<8x32xf32>
    %135 = arith.addf %133, %134 : vector<8x32xf32>
    %136 = math.tanh %135 : vector<8x32xf32>
    %137 = arith.mulf %132, %136 : vector<8x32xf32>
    %c40_48 = arith.constant 40 : index
    %c0_49 = arith.constant 0 : index
    %138 = vector.load %arg11[%c40_48, %c0_49] : memref<64x32xf32, #tpu.memory_space<vmem>>, vector<8x32xf32>
    tpu.vector_store %arg11[%c40_48, %c0_49], %137 {strides = array<i32>} : memref<64x32xf32, #tpu.memory_space<vmem>>, vector<8x32xf32>,
    %c48 = arith.constant 48 : index
    %c0_50 = arith.constant 0 : index
    %139 = vector.load %arg10[%c48, %c0_50] : memref<64x128xf32, #tpu.memory_space<vmem>>, vector<8x128xf32>
    %cst_51 = arith.constant dense<0.000000e+00> : vector<8x128xf32>
    %140 = tpu.matmul %137, %16, %cst_51 {dimension_numbers = #tpu.dot_dimension_numbers<[1], [0], [0], [1], [0, 0, 1, 1], [], []>} : vector<8x32xf32>, vector<32x128xf32>, vector<8x128xf32> -> vector<8x128xf32>
    %141 = arith.addf %139, %140 : vector<8x128xf32>
    %142 = arith.mulf %141, %8 : vector<8x128xf32>
    %143 = math.tanh %142 : vector<8x128xf32>
    %cst_52 = arith.constant 1.000000e+00 : f32
    %144 = vector.broadcast %cst_52 : f32 to vector<8x128xf32>
    %145 = arith.addf %143, %144 : vector<8x128xf32>
    %cst_53 = arith.constant 5.000000e-01 : f32
    %146 = vector.broadcast %cst_53 : f32 to vector<8x128xf32>
    %147 = arith.mulf %146, %145 : vector<8x128xf32>
    %148 = arith.select %5, %143, %147 : vector<8x128xi1>, vector<8x128xf32>
    %149 = vector.extract_strided_slice %148 {offsets = [0, 0], sizes = [8, 32], strides = [1, 1]} : vector<8x128xf32> to vector<8x32xf32>
    %150 = vector.extract_strided_slice %148 {offsets = [0, 32], sizes = [8, 32], strides = [1, 1]} : vector<8x128xf32> to vector<8x32xf32>
    %151 = vector.extract_strided_slice %148 {offsets = [0, 64], sizes = [8, 32], strides = [1, 1]} : vector<8x128xf32> to vector<8x32xf32>
    %152 = vector.extract_strided_slice %148 {offsets = [0, 96], sizes = [8, 32], strides = [1, 1]} : vector<8x128xf32> to vector<8x32xf32>
    %153 = arith.mulf %150, %135 : vector<8x32xf32>
    %154 = arith.mulf %149, %151 : vector<8x32xf32>
    %155 = arith.addf %153, %154 : vector<8x32xf32>
    %156 = math.tanh %155 : vector<8x32xf32>
    %157 = arith.mulf %152, %156 : vector<8x32xf32>
    %c48_54 = arith.constant 48 : index
    %c0_55 = arith.constant 0 : index
    %158 = vector.load %arg11[%c48_54, %c0_55] : memref<64x32xf32, #tpu.memory_space<vmem>>, vector<8x32xf32>
    tpu.vector_store %arg11[%c48_54, %c0_55], %157 {strides = array<i32>} : memref<64x32xf32, #tpu.memory_space<vmem>>, vector<8x32xf32>,
    %c56 = arith.constant 56 : index
    %c0_56 = arith.constant 0 : index
    %159 = vector.load %arg10[%c56, %c0_56] : memref<64x128xf32, #tpu.memory_space<vmem>>, vector<8x128xf32>
    %cst_57 = arith.constant dense<0.000000e+00> : vector<8x128xf32>
    %160 = tpu.matmul %157, %16, %cst_57 {dimension_numbers = #tpu.dot_dimension_numbers<[1], [0], [0], [1], [0, 0, 1, 1], [], []>} : vector<8x32xf32>, vector<32x128xf32>, vector<8x128xf32> -> vector<8x128xf32>
    %161 = arith.addf %159, %160 : vector<8x128xf32>
    %162 = arith.mulf %161, %8 : vector<8x128xf32>
    %163 = math.tanh %162 : vector<8x128xf32>
    %cst_58 = arith.constant 1.000000e+00 : f32
    %164 = vector.broadcast %cst_58 : f32 to vector<8x128xf32>
    %165 = arith.addf %163, %164 : vector<8x128xf32>
    %cst_59 = arith.constant 5.000000e-01 : f32
    %166 = vector.broadcast %cst_59 : f32 to vector<8x128xf32>
    %167 = arith.mulf %166, %165 : vector<8x128xf32>
    %168 = arith.select %5, %163, %167 : vector<8x128xi1>, vector<8x128xf32>
    %169 = vector.extract_strided_slice %168 {offsets = [0, 0], sizes = [8, 32], strides = [1, 1]} : vector<8x128xf32> to vector<8x32xf32>
    %170 = vector.extract_strided_slice %168 {offsets = [0, 32], sizes = [8, 32], strides = [1, 1]} : vector<8x128xf32> to vector<8x32xf32>
    %171 = vector.extract_strided_slice %168 {offsets = [0, 64], sizes = [8, 32], strides = [1, 1]} : vector<8x128xf32> to vector<8x32xf32>
    %172 = vector.extract_strided_slice %168 {offsets = [0, 96], sizes = [8, 32], strides = [1, 1]} : vector<8x128xf32> to vector<8x32xf32>
    %173 = arith.mulf %170, %155 : vector<8x32xf32>
    %174 = arith.mulf %169, %171 : vector<8x32xf32>
    %175 = arith.addf %173, %174 : vector<8x32xf32>
    %176 = math.tanh %175 : vector<8x32xf32>
    %177 = arith.mulf %172, %176 : vector<8x32xf32>
    %c56_60 = arith.constant 56 : index
    %c0_61 = arith.constant 0 : index
    %178 = vector.load %arg11[%c56_60, %c0_61] : memref<64x32xf32, #tpu.memory_space<vmem>>, vector<8x32xf32>
    tpu.vector_store %arg11[%c56_60, %c0_61], %177 {strides = array<i32>} : memref<64x32xf32, #tpu.memory_space<vmem>>, vector<8x32xf32>,
    %c0_62 = arith.constant 0 : index
    %c0_63 = arith.constant 0 : index
    %179 = vector.load %arg11[%c0_62, %c0_63] : memref<64x32xf32, #tpu.memory_space<vmem>>, vector<64x32xf32>
    %c0_64 = arith.constant 0 : index
    %c0_65 = arith.constant 0 : index
    %180 = vector.load %arg4[%c0_64, %c0_65] : memref<32x128xf32, #tpu.memory_space<vmem>>, vector<32x128xf32>
    %cst_66 = arith.constant dense<0.000000e+00> : vector<64x128xf32>
    %181 = tpu.matmul %179, %180, %cst_66 {dimension_numbers = #tpu.dot_dimension_numbers<[1], [0], [0], [1], [0, 0, 1, 1], [], []>} : vector<64x32xf32>, vector<32x128xf32>, vector<64x128xf32> -> vector<64x128xf32>
    %c0_67 = arith.constant 0 : index
    %c0_68 = arith.constant 0 : index
    %182 = vector.load %arg6[%c0_67, %c0_68] : memref<1x128xf32, #tpu.memory_space<vmem>>, vector<1x128xf32>
    %183 = vector.broadcast %182 : vector<1x128xf32> to vector<64x128xf32>
    %184 = arith.addf %181, %183 : vector<64x128xf32>
    %c0_69 = arith.constant 0 : index
    %c0_70 = arith.constant 0 : index
    %185 = vector.load %arg10[%c0_69, %c0_70] : memref<64x128xf32, #tpu.memory_space<vmem>>, vector<64x128xf32>
    tpu.vector_store %arg10[%c0_69, %c0_70], %184 {strides = array<i32>} : memref<64x128xf32, #tpu.memory_space<vmem>>, vector<64x128xf32>,
    %c0_71 = arith.constant 0 : index
    %c0_72 = arith.constant 0 : index
    %186 = vector.load %arg5[%c0_71, %c0_72] : memref<32x128xf32, #tpu.memory_space<vmem>>, vector<32x128xf32>
    %cst_73 = arith.constant 0.000000e+00 : f32
    %187 = vector.broadcast %cst_73 : f32 to vector<8x32xf32>
    %cst_74 = arith.constant 0.000000e+00 : f32
    %188 = vector.broadcast %cst_74 : f32 to vector<8x32xf32>
    %c0_75 = arith.constant 0 : index
    %c0_76 = arith.constant 0 : index
    %189 = vector.load %arg10[%c0_75, %c0_76] : memref<64x128xf32, #tpu.memory_space<vmem>>, vector<8x128xf32>
    %cst_77 = arith.constant dense<0.000000e+00> : vector<8x128xf32>
    %190 = tpu.matmul %187, %186, %cst_77 {dimension_numbers = #tpu.dot_dimension_numbers<[1], [0], [0], [1], [0, 0, 1, 1], [], []>} : vector<8x32xf32>, vector<32x128xf32>, vector<8x128xf32> -> vector<8x128xf32>
    %191 = arith.addf %189, %190 : vector<8x128xf32>
    %192 = arith.mulf %191, %8 : vector<8x128xf32>
    %193 = math.tanh %192 : vector<8x128xf32>
    %cst_78 = arith.constant 1.000000e+00 : f32
    %194 = vector.broadcast %cst_78 : f32 to vector<8x128xf32>
    %195 = arith.addf %193, %194 : vector<8x128xf32>
    %cst_79 = arith.constant 5.000000e-01 : f32
    %196 = vector.broadcast %cst_79 : f32 to vector<8x128xf32>
    %197 = arith.mulf %196, %195 : vector<8x128xf32>
    %198 = arith.select %5, %193, %197 : vector<8x128xi1>, vector<8x128xf32>
    %199 = vector.extract_strided_slice %198 {offsets = [0, 0], sizes = [8, 32], strides = [1, 1]} : vector<8x128xf32> to vector<8x32xf32>
    %200 = vector.extract_strided_slice %198 {offsets = [0, 32], sizes = [8, 32], strides = [1, 1]} : vector<8x128xf32> to vector<8x32xf32>
    %201 = vector.extract_strided_slice %198 {offsets = [0, 64], sizes = [8, 32], strides = [1, 1]} : vector<8x128xf32> to vector<8x32xf32>
    %202 = vector.extract_strided_slice %198 {offsets = [0, 96], sizes = [8, 32], strides = [1, 1]} : vector<8x128xf32> to vector<8x32xf32>
    %203 = arith.mulf %200, %188 : vector<8x32xf32>
    %204 = arith.mulf %199, %201 : vector<8x32xf32>
    %205 = arith.addf %203, %204 : vector<8x32xf32>
    %206 = math.tanh %205 : vector<8x32xf32>
    %207 = arith.mulf %202, %206 : vector<8x32xf32>
    %c0_80 = arith.constant 0 : index
    %c0_81 = arith.constant 0 : index
    %208 = vector.load %arg11[%c0_80, %c0_81] : memref<64x32xf32, #tpu.memory_space<vmem>>, vector<8x32xf32>
    tpu.vector_store %arg11[%c0_80, %c0_81], %207 {strides = array<i32>} : memref<64x32xf32, #tpu.memory_space<vmem>>, vector<8x32xf32>,
    %c8_82 = arith.constant 8 : index
    %c0_83 = arith.constant 0 : index
    %209 = vector.load %arg10[%c8_82, %c0_83] : memref<64x128xf32, #tpu.memory_space<vmem>>, vector<8x128xf32>
    %cst_84 = arith.constant dense<0.000000e+00> : vector<8x128xf32>
    %210 = tpu.matmul %207, %186, %cst_84 {dimension_numbers = #tpu.dot_dimension_numbers<[1], [0], [0], [1], [0, 0, 1, 1], [], []>} : vector<8x32xf32>, vector<32x128xf32>, vector<8x128xf32> -> vector<8x128xf32>
    %211 = arith.addf %209, %210 : vector<8x128xf32>
    %212 = arith.mulf %211, %8 : vector<8x128xf32>
    %213 = math.tanh %212 : vector<8x128xf32>
    %cst_85 = arith.constant 1.000000e+00 : f32
    %214 = vector.broadcast %cst_85 : f32 to vector<8x128xf32>
    %215 = arith.addf %213, %214 : vector<8x128xf32>
    %cst_86 = arith.constant 5.000000e-01 : f32
    %216 = vector.broadcast %cst_86 : f32 to vector<8x128xf32>
    %217 = arith.mulf %216, %215 : vector<8x128xf32>
    %218 = arith.select %5, %213, %217 : vector<8x128xi1>, vector<8x128xf32>
    %219 = vector.extract_strided_slice %218 {offsets = [0, 0], sizes = [8, 32], strides = [1, 1]} : vector<8x128xf32> to vector<8x32xf32>
    %220 = vector.extract_strided_slice %218 {offsets = [0, 32], sizes = [8, 32], strides = [1, 1]} : vector<8x128xf32> to vector<8x32xf32>
    %221 = vector.extract_strided_slice %218 {offsets = [0, 64], sizes = [8, 32], strides = [1, 1]} : vector<8x128xf32> to vector<8x32xf32>
    %222 = vector.extract_strided_slice %218 {offsets = [0, 96], sizes = [8, 32], strides = [1, 1]} : vector<8x128xf32> to vector<8x32xf32>
    %223 = arith.mulf %220, %205 : vector<8x32xf32>
    %224 = arith.mulf %219, %221 : vector<8x32xf32>
    %225 = arith.addf %223, %224 : vector<8x32xf32>
    %226 = math.tanh %225 : vector<8x32xf32>
    %227 = arith.mulf %222, %226 : vector<8x32xf32>
    %c8_87 = arith.constant 8 : index
    %c0_88 = arith.constant 0 : index
    %228 = vector.load %arg11[%c8_87, %c0_88] : memref<64x32xf32, #tpu.memory_space<vmem>>, vector<8x32xf32>
    tpu.vector_store %arg11[%c8_87, %c0_88], %227 {strides = array<i32>} : memref<64x32xf32, #tpu.memory_space<vmem>>, vector<8x32xf32>,
    %c16_89 = arith.constant 16 : index
    %c0_90 = arith.constant 0 : index
    %229 = vector.load %arg10[%c16_89, %c0_90] : memref<64x128xf32, #tpu.memory_space<vmem>>, vector<8x128xf32>
    %cst_91 = arith.constant dense<0.000000e+00> : vector<8x128xf32>
    %230 = tpu.matmul %227, %186, %cst_91 {dimension_numbers = #tpu.dot_dimension_numbers<[1], [0], [0], [1], [0, 0, 1, 1], [], []>} : vector<8x32xf32>, vector<32x128xf32>, vector<8x128xf32> -> vector<8x128xf32>
    %231 = arith.addf %229, %230 : vector<8x128xf32>
    %232 = arith.mulf %231, %8 : vector<8x128xf32>
    %233 = math.tanh %232 : vector<8x128xf32>
    %cst_92 = arith.constant 1.000000e+00 : f32
    %234 = vector.broadcast %cst_92 : f32 to vector<8x128xf32>
    %235 = arith.addf %233, %234 : vector<8x128xf32>
    %cst_93 = arith.constant 5.000000e-01 : f32
    %236 = vector.broadcast %cst_93 : f32 to vector<8x128xf32>
    %237 = arith.mulf %236, %235 : vector<8x128xf32>
    %238 = arith.select %5, %233, %237 : vector<8x128xi1>, vector<8x128xf32>
    %239 = vector.extract_strided_slice %238 {offsets = [0, 0], sizes = [8, 32], strides = [1, 1]} : vector<8x128xf32> to vector<8x32xf32>
    %240 = vector.extract_strided_slice %238 {offsets = [0, 32], sizes = [8, 32], strides = [1, 1]} : vector<8x128xf32> to vector<8x32xf32>
    %241 = vector.extract_strided_slice %238 {offsets = [0, 64], sizes = [8, 32], strides = [1, 1]} : vector<8x128xf32> to vector<8x32xf32>
    %242 = vector.extract_strided_slice %238 {offsets = [0, 96], sizes = [8, 32], strides = [1, 1]} : vector<8x128xf32> to vector<8x32xf32>
    %243 = arith.mulf %240, %225 : vector<8x32xf32>
    %244 = arith.mulf %239, %241 : vector<8x32xf32>
    %245 = arith.addf %243, %244 : vector<8x32xf32>
    %246 = math.tanh %245 : vector<8x32xf32>
    %247 = arith.mulf %242, %246 : vector<8x32xf32>
    %c16_94 = arith.constant 16 : index
    %c0_95 = arith.constant 0 : index
    %248 = vector.load %arg11[%c16_94, %c0_95] : memref<64x32xf32, #tpu.memory_space<vmem>>, vector<8x32xf32>
    tpu.vector_store %arg11[%c16_94, %c0_95], %247 {strides = array<i32>} : memref<64x32xf32, #tpu.memory_space<vmem>>, vector<8x32xf32>,
    %c24_96 = arith.constant 24 : index
    %c0_97 = arith.constant 0 : index
    %249 = vector.load %arg10[%c24_96, %c0_97] : memref<64x128xf32, #tpu.memory_space<vmem>>, vector<8x128xf32>
    %cst_98 = arith.constant dense<0.000000e+00> : vector<8x128xf32>
    %250 = tpu.matmul %247, %186, %cst_98 {dimension_numbers = #tpu.dot_dimension_numbers<[1], [0], [0], [1], [0, 0, 1, 1], [], []>} : vector<8x32xf32>, vector<32x128xf32>, vector<8x128xf32> -> vector<8x128xf32>
    %251 = arith.addf %249, %250 : vector<8x128xf32>
    %252 = arith.mulf %251, %8 : vector<8x128xf32>
    %253 = math.tanh %252 : vector<8x128xf32>
    %cst_99 = arith.constant 1.000000e+00 : f32
    %254 = vector.broadcast %cst_99 : f32 to vector<8x128xf32>
    %255 = arith.addf %253, %254 : vector<8x128xf32>
    %cst_100 = arith.constant 5.000000e-01 : f32
    %256 = vector.broadcast %cst_100 : f32 to vector<8x128xf32>
    %257 = arith.mulf %256, %255 : vector<8x128xf32>
    %258 = arith.select %5, %253, %257 : vector<8x128xi1>, vector<8x128xf32>
    %259 = vector.extract_strided_slice %258 {offsets = [0, 0], sizes = [8, 32], strides = [1, 1]} : vector<8x128xf32> to vector<8x32xf32>
    %260 = vector.extract_strided_slice %258 {offsets = [0, 32], sizes = [8, 32], strides = [1, 1]} : vector<8x128xf32> to vector<8x32xf32>
    %261 = vector.extract_strided_slice %258 {offsets = [0, 64], sizes = [8, 32], strides = [1, 1]} : vector<8x128xf32> to vector<8x32xf32>
    %262 = vector.extract_strided_slice %258 {offsets = [0, 96], sizes = [8, 32], strides = [1, 1]} : vector<8x128xf32> to vector<8x32xf32>
    %263 = arith.mulf %260, %245 : vector<8x32xf32>
    %264 = arith.mulf %259, %261 : vector<8x32xf32>
    %265 = arith.addf %263, %264 : vector<8x32xf32>
    %266 = math.tanh %265 : vector<8x32xf32>
    %267 = arith.mulf %262, %266 : vector<8x32xf32>
    %c24_101 = arith.constant 24 : index
    %c0_102 = arith.constant 0 : index
    %268 = vector.load %arg11[%c24_101, %c0_102] : memref<64x32xf32, #tpu.memory_space<vmem>>, vector<8x32xf32>
    tpu.vector_store %arg11[%c24_101, %c0_102], %267 {strides = array<i32>} : memref<64x32xf32, #tpu.memory_space<vmem>>, vector<8x32xf32>,
    %c32_103 = arith.constant 32 : index
    %c0_104 = arith.constant 0 : index
    %269 = vector.load %arg10[%c32_103, %c0_104] : memref<64x128xf32, #tpu.memory_space<vmem>>, vector<8x128xf32>
    %cst_105 = arith.constant dense<0.000000e+00> : vector<8x128xf32>
    %270 = tpu.matmul %267, %186, %cst_105 {dimension_numbers = #tpu.dot_dimension_numbers<[1], [0], [0], [1], [0, 0, 1, 1], [], []>} : vector<8x32xf32>, vector<32x128xf32>, vector<8x128xf32> -> vector<8x128xf32>
    %271 = arith.addf %269, %270 : vector<8x128xf32>
    %272 = arith.mulf %271, %8 : vector<8x128xf32>
    %273 = math.tanh %272 : vector<8x128xf32>
    %cst_106 = arith.constant 1.000000e+00 : f32
    %274 = vector.broadcast %cst_106 : f32 to vector<8x128xf32>
    %275 = arith.addf %273, %274 : vector<8x128xf32>
    %cst_107 = arith.constant 5.000000e-01 : f32
    %276 = vector.broadcast %cst_107 : f32 to vector<8x128xf32>
    %277 = arith.mulf %276, %275 : vector<8x128xf32>
    %278 = arith.select %5, %273, %277 : vector<8x128xi1>, vector<8x128xf32>
    %279 = vector.extract_strided_slice %278 {offsets = [0, 0], sizes = [8, 32], strides = [1, 1]} : vector<8x128xf32> to vector<8x32xf32>
    %280 = vector.extract_strided_slice %278 {offsets = [0, 32], sizes = [8, 32], strides = [1, 1]} : vector<8x128xf32> to vector<8x32xf32>
    %281 = vector.extract_strided_slice %278 {offsets = [0, 64], sizes = [8, 32], strides = [1, 1]} : vector<8x128xf32> to vector<8x32xf32>
    %282 = vector.extract_strided_slice %278 {offsets = [0, 96], sizes = [8, 32], strides = [1, 1]} : vector<8x128xf32> to vector<8x32xf32>
    %283 = arith.mulf %280, %265 : vector<8x32xf32>
    %284 = arith.mulf %279, %281 : vector<8x32xf32>
    %285 = arith.addf %283, %284 : vector<8x32xf32>
    %286 = math.tanh %285 : vector<8x32xf32>
    %287 = arith.mulf %282, %286 : vector<8x32xf32>
    %c32_108 = arith.constant 32 : index
    %c0_109 = arith.constant 0 : index
    %288 = vector.load %arg11[%c32_108, %c0_109] : memref<64x32xf32, #tpu.memory_space<vmem>>, vector<8x32xf32>
    tpu.vector_store %arg11[%c32_108, %c0_109], %287 {strides = array<i32>} : memref<64x32xf32, #tpu.memory_space<vmem>>, vector<8x32xf32>,
    %c40_110 = arith.constant 40 : index
    %c0_111 = arith.constant 0 : index
    %289 = vector.load %arg10[%c40_110, %c0_111] : memref<64x128xf32, #tpu.memory_space<vmem>>, vector<8x128xf32>
    %cst_112 = arith.constant dense<0.000000e+00> : vector<8x128xf32>
    %290 = tpu.matmul %287, %186, %cst_112 {dimension_numbers = #tpu.dot_dimension_numbers<[1], [0], [0], [1], [0, 0, 1, 1], [], []>} : vector<8x32xf32>, vector<32x128xf32>, vector<8x128xf32> -> vector<8x128xf32>
    %291 = arith.addf %289, %290 : vector<8x128xf32>
    %292 = arith.mulf %291, %8 : vector<8x128xf32>
    %293 = math.tanh %292 : vector<8x128xf32>
    %cst_113 = arith.constant 1.000000e+00 : f32
    %294 = vector.broadcast %cst_113 : f32 to vector<8x128xf32>
    %295 = arith.addf %293, %294 : vector<8x128xf32>
    %cst_114 = arith.constant 5.000000e-01 : f32
    %296 = vector.broadcast %cst_114 : f32 to vector<8x128xf32>
    %297 = arith.mulf %296, %295 : vector<8x128xf32>
    %298 = arith.select %5, %293, %297 : vector<8x128xi1>, vector<8x128xf32>
    %299 = vector.extract_strided_slice %298 {offsets = [0, 0], sizes = [8, 32], strides = [1, 1]} : vector<8x128xf32> to vector<8x32xf32>
    %300 = vector.extract_strided_slice %298 {offsets = [0, 32], sizes = [8, 32], strides = [1, 1]} : vector<8x128xf32> to vector<8x32xf32>
    %301 = vector.extract_strided_slice %298 {offsets = [0, 64], sizes = [8, 32], strides = [1, 1]} : vector<8x128xf32> to vector<8x32xf32>
    %302 = vector.extract_strided_slice %298 {offsets = [0, 96], sizes = [8, 32], strides = [1, 1]} : vector<8x128xf32> to vector<8x32xf32>
    %303 = arith.mulf %300, %285 : vector<8x32xf32>
    %304 = arith.mulf %299, %301 : vector<8x32xf32>
    %305 = arith.addf %303, %304 : vector<8x32xf32>
    %306 = math.tanh %305 : vector<8x32xf32>
    %307 = arith.mulf %302, %306 : vector<8x32xf32>
    %c40_115 = arith.constant 40 : index
    %c0_116 = arith.constant 0 : index
    %308 = vector.load %arg11[%c40_115, %c0_116] : memref<64x32xf32, #tpu.memory_space<vmem>>, vector<8x32xf32>
    tpu.vector_store %arg11[%c40_115, %c0_116], %307 {strides = array<i32>} : memref<64x32xf32, #tpu.memory_space<vmem>>, vector<8x32xf32>,
    %c48_117 = arith.constant 48 : index
    %c0_118 = arith.constant 0 : index
    %309 = vector.load %arg10[%c48_117, %c0_118] : memref<64x128xf32, #tpu.memory_space<vmem>>, vector<8x128xf32>
    %cst_119 = arith.constant dense<0.000000e+00> : vector<8x128xf32>
    %310 = tpu.matmul %307, %186, %cst_119 {dimension_numbers = #tpu.dot_dimension_numbers<[1], [0], [0], [1], [0, 0, 1, 1], [], []>} : vector<8x32xf32>, vector<32x128xf32>, vector<8x128xf32> -> vector<8x128xf32>
    %311 = arith.addf %309, %310 : vector<8x128xf32>
    %312 = arith.mulf %311, %8 : vector<8x128xf32>
    %313 = math.tanh %312 : vector<8x128xf32>
    %cst_120 = arith.constant 1.000000e+00 : f32
    %314 = vector.broadcast %cst_120 : f32 to vector<8x128xf32>
    %315 = arith.addf %313, %314 : vector<8x128xf32>
    %cst_121 = arith.constant 5.000000e-01 : f32
    %316 = vector.broadcast %cst_121 : f32 to vector<8x128xf32>
    %317 = arith.mulf %316, %315 : vector<8x128xf32>
    %318 = arith.select %5, %313, %317 : vector<8x128xi1>, vector<8x128xf32>
    %319 = vector.extract_strided_slice %318 {offsets = [0, 0], sizes = [8, 32], strides = [1, 1]} : vector<8x128xf32> to vector<8x32xf32>
    %320 = vector.extract_strided_slice %318 {offsets = [0, 32], sizes = [8, 32], strides = [1, 1]} : vector<8x128xf32> to vector<8x32xf32>
    %321 = vector.extract_strided_slice %318 {offsets = [0, 64], sizes = [8, 32], strides = [1, 1]} : vector<8x128xf32> to vector<8x32xf32>
    %322 = vector.extract_strided_slice %318 {offsets = [0, 96], sizes = [8, 32], strides = [1, 1]} : vector<8x128xf32> to vector<8x32xf32>
    %323 = arith.mulf %320, %305 : vector<8x32xf32>
    %324 = arith.mulf %319, %321 : vector<8x32xf32>
    %325 = arith.addf %323, %324 : vector<8x32xf32>
    %326 = math.tanh %325 : vector<8x32xf32>
    %327 = arith.mulf %322, %326 : vector<8x32xf32>
    %c48_122 = arith.constant 48 : index
    %c0_123 = arith.constant 0 : index
    %328 = vector.load %arg11[%c48_122, %c0_123] : memref<64x32xf32, #tpu.memory_space<vmem>>, vector<8x32xf32>
    tpu.vector_store %arg11[%c48_122, %c0_123], %327 {strides = array<i32>} : memref<64x32xf32, #tpu.memory_space<vmem>>, vector<8x32xf32>,
    %c56_124 = arith.constant 56 : index
    %c0_125 = arith.constant 0 : index
    %329 = vector.load %arg10[%c56_124, %c0_125] : memref<64x128xf32, #tpu.memory_space<vmem>>, vector<8x128xf32>
    %cst_126 = arith.constant dense<0.000000e+00> : vector<8x128xf32>
    %330 = tpu.matmul %327, %186, %cst_126 {dimension_numbers = #tpu.dot_dimension_numbers<[1], [0], [0], [1], [0, 0, 1, 1], [], []>} : vector<8x32xf32>, vector<32x128xf32>, vector<8x128xf32> -> vector<8x128xf32>
    %331 = arith.addf %329, %330 : vector<8x128xf32>
    %332 = arith.mulf %331, %8 : vector<8x128xf32>
    %333 = math.tanh %332 : vector<8x128xf32>
    %cst_127 = arith.constant 1.000000e+00 : f32
    %334 = vector.broadcast %cst_127 : f32 to vector<8x128xf32>
    %335 = arith.addf %333, %334 : vector<8x128xf32>
    %cst_128 = arith.constant 5.000000e-01 : f32
    %336 = vector.broadcast %cst_128 : f32 to vector<8x128xf32>
    %337 = arith.mulf %336, %335 : vector<8x128xf32>
    %338 = arith.select %5, %333, %337 : vector<8x128xi1>, vector<8x128xf32>
    %339 = vector.extract_strided_slice %338 {offsets = [0, 0], sizes = [8, 32], strides = [1, 1]} : vector<8x128xf32> to vector<8x32xf32>
    %340 = vector.extract_strided_slice %338 {offsets = [0, 32], sizes = [8, 32], strides = [1, 1]} : vector<8x128xf32> to vector<8x32xf32>
    %341 = vector.extract_strided_slice %338 {offsets = [0, 64], sizes = [8, 32], strides = [1, 1]} : vector<8x128xf32> to vector<8x32xf32>
    %342 = vector.extract_strided_slice %338 {offsets = [0, 96], sizes = [8, 32], strides = [1, 1]} : vector<8x128xf32> to vector<8x32xf32>
    %343 = arith.mulf %340, %325 : vector<8x32xf32>
    %344 = arith.mulf %339, %341 : vector<8x32xf32>
    %345 = arith.addf %343, %344 : vector<8x32xf32>
    %346 = math.tanh %345 : vector<8x32xf32>
    %347 = arith.mulf %342, %346 : vector<8x32xf32>
    %c56_129 = arith.constant 56 : index
    %c0_130 = arith.constant 0 : index
    %348 = vector.load %arg11[%c56_129, %c0_130] : memref<64x32xf32, #tpu.memory_space<vmem>>, vector<8x32xf32>
    tpu.vector_store %arg11[%c56_129, %c0_130], %347 {strides = array<i32>} : memref<64x32xf32, #tpu.memory_space<vmem>>, vector<8x32xf32>,
    %c56_131 = arith.constant 56 : index
    %c0_132 = arith.constant 0 : index
    %349 = vector.load %arg11[%c56_131, %c0_132] : memref<64x32xf32, #tpu.memory_space<vmem>>, vector<8x32xf32>
    %cst_133 = arith.constant 0.000000e+00 : f32
    %350 = vector.broadcast %cst_133 : f32 to vector<8x32xf32>
    %351 = arith.cmpf ogt, %349, %350 : vector<8x32xf32>
    %352 = math.exp %349 : vector<8x32xf32>
    %cst_134 = arith.constant 1.000000e+00 : f32
    %353 = vector.broadcast %cst_134 : f32 to vector<8x32xf32>
    %354 = arith.subf %352, %353 : vector<8x32xf32>
    %355 = arith.select %351, %349, %354 : vector<8x32xi1>, vector<8x32xf32>
    %c0_135 = arith.constant 0 : index
    %c0_136 = arith.constant 0 : index
    %356 = vector.load %arg7[%c0_135, %c0_136] : memref<32x4xf32, #tpu.memory_space<vmem>>, vector<32x4xf32>
    %cst_137 = arith.constant dense<0.000000e+00> : vector<8x4xf32>
    %357 = tpu.matmul %355, %356, %cst_137 {dimension_numbers = #tpu.dot_dimension_numbers<[1], [0], [0], [1], [0, 0, 1, 1], [], []>} : vector<8x32xf32>, vector<32x4xf32>, vector<8x4xf32> -> vector<8x4xf32>
    %c0_138 = arith.constant 0 : index
    %c0_139 = arith.constant 0 : index
    %358 = vector.load %arg8[%c0_138, %c0_139] : memref<1x4xf32, #tpu.memory_space<vmem>>, vector<1x4xf32>
    %359 = vector.broadcast %358 : vector<1x4xf32> to vector<8x4xf32>
    %360 = arith.addf %357, %359 : vector<8x4xf32>
    %c0_140 = arith.constant 0 : index
    %c0_141 = arith.constant 0 : index
    %361 = vector.load %arg9[%c0_140, %c0_141] : memref<8x4xf32, #tpu.memory_space<vmem>>, vector<8x4xf32>
    tpu.vector_store %arg9[%c0_140, %c0_141], %360 {strides = array<i32>} : memref<8x4xf32, #tpu.memory_space<vmem>>, vector<8x4xf32>,
    return
  }
}

</mosaic_0001>

<llo_original>
// kernel: lstm2_forward.1
$region0: #{lstm2_forward.1}
  #allocation0 [shape = 'u32[]', space=smem, size = 0x4, offset = 0x4, fixed_abs, tag = 'smem constant byte address 0x4 - core index']
  #allocation1 [shape = 'u32[144,128]{1,0:T(1,128)}', space=vmem, size = 0x12000, scoped, tag = 'internal scratch']
  #allocation2 [shape = 'f32[64,128]{1,0:T(8,128)}', space=vmem, size = 0x8000, scoped, tag = 'scratch operand']
  #allocation3 [shape = 'f32[64,32]{1,0:T(8,128)}', space=vmem, size = 0x8000, scoped, tag = 'scratch operand']
  %s0 = inlined_call_operand.vmem [shape: f32[64,16], index: 0, kind: input, shape index: {}]
  %s1 = inlined_call_operand.vmem [shape: f32[16,128], index: 1, kind: input, shape index: {}]
  %s2 = inlined_call_operand.vmem [shape: f32[32,128], index: 2, kind: input, shape index: {}]
  %s3 = inlined_call_operand.vmem [shape: f32[1,128], index: 3, kind: input, shape index: {}]
  %s4 = inlined_call_operand.vmem [shape: f32[32,128], index: 4, kind: input, shape index: {}]
  %s5 = inlined_call_operand.vmem [shape: f32[32,128], index: 5, kind: input, shape index: {}]
  %s6 = inlined_call_operand.vmem [shape: f32[1,128], index: 6, kind: input, shape index: {}]
  %s7 = inlined_call_operand.vmem [shape: f32[32,4], index: 7, kind: input, shape index: {}]
  %s8 = inlined_call_operand.vmem [shape: f32[1,4], index: 8, kind: input, shape index: {}]
  %s9 = inlined_call_operand.vmem [shape: f32[8,4], index: 9, kind: output, shape index: {}]
  %s10 = sld [smem:[#allocation0]]
  $region46: #{lstm2_forward.1} parent=0
    _
  %s12 = ssub.s32 1, %s10
  %s13 = scalar_select 0, %s12, %s10
  // Predicated region
  $region2: #{lstm2_forward.1} parent=0 // pred_check
    _
  $region3: #{lstm2_forward.1} parent=0 // pred_check_branch
    %15 = sbr.rel (0) target = $region5
  $region4: #{lstm2_forward.1} parent=0 // pred_region
    _
  $region5: #{lstm2_forward.1} parent=0 // pred_fallthru
    _
  // Predicated region
  $region6: #{lstm2_forward.1} parent=0 // pred_check
    _
  $region7: #{lstm2_forward.1} parent=0 // pred_check_branch
    %17 = sbr.rel (0) target = $region9
  $region8: #{lstm2_forward.1} parent=0 // pred_region
    _
  $region9: #{lstm2_forward.1} parent=0 // pred_fallthru
    _
  // Predicated region
  $region10: #{lstm2_forward.1} parent=0 // pred_check
    _
  $region11: #{lstm2_forward.1} parent=0 // pred_check_branch
    %19 = sbr.rel (0) target = $region13
  $region12: #{lstm2_forward.1} parent=0 // pred_region
    _
  $region13: #{lstm2_forward.1} parent=0 // pred_fallthru
    _
  // Predicated region
  $region14: #{lstm2_forward.1} parent=0 // pred_check
    _
  $region15: #{lstm2_forward.1} parent=0 // pred_check_branch
    %21 = sbr.rel (0) target = $region17
  $region16: #{lstm2_forward.1} parent=0 // pred_region
    _
  $region17: #{lstm2_forward.1} parent=0 // pred_fallthru
    _
  // Predicated region
  $region18: #{lstm2_forward.1} parent=0 // pred_check
    _
  $region19: #{lstm2_forward.1} parent=0 // pred_check_branch
    %23 = sbr.rel (0) target = $region21
  $region20: #{lstm2_forward.1} parent=0 // pred_region
    _
  $region21: #{lstm2_forward.1} parent=0 // pred_fallthru
    _
  // Predicated region
  $region22: #{lstm2_forward.1} parent=0 // pred_check
    _
  $region23: #{lstm2_forward.1} parent=0 // pred_check_branch
    %25 = sbr.rel (0) target = $region25
  $region24: #{lstm2_forward.1} parent=0 // pred_region
    _
  $region25: #{lstm2_forward.1} parent=0 // pred_fallthru
    _
  // Predicated region
  $region26: #{lstm2_forward.1} parent=0 // pred_check
    _
  $region27: #{lstm2_forward.1} parent=0 // pred_check_branch
    %27 = sbr.rel (0) target = $region29
  $region28: #{lstm2_forward.1} parent=0 // pred_region
    _
  $region29: #{lstm2_forward.1} parent=0 // pred_fallthru
    _
  // Predicated region
  $region30: #{lstm2_forward.1} parent=0 // pred_check
    _
  $region31: #{lstm2_forward.1} parent=0 // pred_check_branch
    %29 = sbr.rel (0) target = $region33
  $region32: #{lstm2_forward.1} parent=0 // pred_region
    _
  $region33: #{lstm2_forward.1} parent=0 // pred_fallthru
    _
  // Predicated region
  $region34: #{lstm2_forward.1} parent=0 // pred_check
    _
  $region35: #{lstm2_forward.1} parent=0 // pred_check_branch
    %31 = sbr.rel (0) target = $region37
  $region36: #{lstm2_forward.1} parent=0 // pred_region
    _
  $region37: #{lstm2_forward.1} parent=0 // pred_fallthru
    _
  %v32 = vlaneseq
  %v33 = vand.u32 %v32, 127
  %vm34 = vcmp.ge.s32.totalorder %v33, 64
  %vm35 = vcmp.lt.s32.totalorder %v33, 96
  %vm36 = vmand %vm34, %vm35
  %v37 = vsel %vm36, 1.0, 0.5
  %v38 = vld [vmem:[%s0] sm:$0xff]
  %v39 = vld [vmem:[%s0 + $0x8] sm:$0xff]
  %v40 = vld [vmem:[%s0 + $0x10] sm:$0xff]
  %v41 = vld [vmem:[%s0 + $0x18] sm:$0xff]
  %v42 = vld [vmem:[%s0 + $0x20] sm:$0xff]
  %v43 = vld [vmem:[%s0 + $0x28] sm:$0xff]
  %v44 = vld [vmem:[%s0 + $0x30] sm:$0xff]
  %v45 = vld [vmem:[%s0 + $0x38] sm:$0xff]
  %v46 = vld [vmem:[%s1] sm:$0xff]
  %v47 = vld [vmem:[%s1 + $0x8] sm:$0xff]
  %v48 = vld [vmem:[%s3] sm:$0x1]
  %v50 = vlaneseq
  %v51 = vshrl.u32 %v50, 7
  %v52 = vsub.s32 0, %v51
  %v53 = vrot.slane %v48, %v52
  %vm55 = vcmask 130048
  %v57 = vsel %vm55, %v38, 0
  %v60 = vsel %vm55, %v39, 0
  %v63 = vsel %vm55, %v40, 0
  %v66 = vsel %vm55, %v41, 0
  %v69 = vsel %vm55, %v42, 0
  %v72 = vsel %vm55, %v43, 0
  %v75 = vsel %vm55, %v44, 0
  %v78 = vsel %vm55, %v45, 0
  %80 = vmatprep.subr.mxu0 0.0
  %81 = vmatpush1.msra.mxu0 0.0
  %82 = vmatprep.subr.mxu0 0.0
  %83 = vmatpush1.msra.mxu0 0.0
  %84 = vmatprep.subr.mxu0 0.0
  %85 = vmatpush1.msra.mxu0 0.0
  %86 = vmatprep.subr.mxu0 0.0
  %87 = vmatpush1.msra.mxu0 0.0
  %88 = vmatprep.subr.mxu0 0.0
  %89 = vmatpush1.msra.mxu0 0.0
  %90 = vmatprep.subr.mxu0 0.0
  %91 = vmatpush1.msra.mxu0 0.0
  %92 = vmatprep.subr.mxu0 0.0
  %93 = vmatpush1.msra.mxu0 0.0
  %94 = vmatprep.subr.mxu0 0.0
  %95 = vmatpush1.msra.mxu0 0.0
  %96 = vmatprep.subr.mxu0 0.0
  %97 = vmatpush1.msra.mxu0 0.0
  %98 = vmatprep.subr.mxu0 0.0
  %99 = vmatpush1.msra.mxu0 0.0
  %100 = vmatprep.subr.mxu0 0.0
  %101 = vmatpush1.msra.mxu0 0.0
  %102 = vmatprep.subr.mxu0 0.0
  %103 = vmatpush1.msra.mxu0 0.0
  %104 = vmatprep.subr.mxu0 0.0
  %105 = vmatpush1.msra.mxu0 0.0
  %106 = vmatprep.subr.mxu0 0.0
  %107 = vmatpush1.msra.mxu0 0.0
  %108 = vmatprep.subr.mxu0 0.0
  %109 = vmatpush1.msra.mxu0 %v47
  %110 = vmatprep.subr.mxu0 0.0
  %111 = vmatpush1.msra.mxu0 %v46
  %112 = vmatprep.subr.mxu0 0.0
  %113 = vmatpush2.msra.mxu0 0.0
  %114 = vmatprep.subr.mxu0 0.0
  %115 = vmatpush2.msra.mxu0 0.0
  %116 = vmatprep.subr.mxu0 0.0
  %117 = vmatpush2.msra.mxu0 0.0
  %118 = vmatprep.subr.mxu0 0.0
  %119 = vmatpush2.msra.mxu0 0.0
  %120 = vmatprep.subr.mxu0 0.0
  %121 = vmatpush2.msra.mxu0 0.0
  %122 = vmatprep.subr.mxu0 0.0
  %123 = vmatpush2.msra.mxu0 0.0
  %124 = vmatprep.subr.mxu0 0.0
  %125 = vmatpush2.msra.mxu0 0.0
  %126 = vmatprep.subr.mxu0 0.0
  %127 = vmatpush2.msra.mxu0 0.0
  %128 = vmatprep.subr.mxu0 0.0
  %129 = vmatpush2.msra.mxu0 0.0
  %130 = vmatprep.subr.mxu0 0.0
  %131 = vmatpush2.msra.mxu0 0.0
  %132 = vmatprep.subr.mxu0 0.0
  %133 = vmatpush2.msra.mxu0 0.0
  %134 = vmatprep.subr.mxu0 0.0
  %135 = vmatpush2.msra.mxu0 0.0
  %136 = vmatprep.subr.mxu0 0.0
  %137 = vmatpush2.msra.mxu0 0.0
  %138 = vmatprep.subr.mxu0 0.0
  %139 = vmatpush2.msra.mxu0 0.0
  %140 = vmatprep.subr.mxu0 0.0
  %141 = vmatpush2.msra.mxu0 0.0
  %142 = vmatprep.subr.mxu0 0.0
  %143 = vmatpush2.msra.mxu0 0.0
  %144 = vmatprep.mubr.f32.mxu0 0.0
  %145 = vmatmul.mubr.f32.gmra.mxu0 %v57
  %v146 = vpop.f32.mrf.mxu0
  %v147 = vadd.f32 %v53, %v146
  %v148 = vpop.f32.mrf.mxu0
  %149 = vmatprep.mubr.f32.mxu0 0.0
  %150 = vmatmul.mubr.f32.gmra.mxu0 %v60
  %v151 = vpop.f32.mrf.mxu0
  %v152 = vadd.f32 %v53, %v151
  %v153 = vpop.f32.mrf.mxu0
  %154 = vmatprep.mubr.f32.mxu0 0.0
  %155 = vmatmul.mubr.f32.gmra.mxu0 %v63
  %v156 = vpop.f32.mrf.mxu0
  %v157 = vadd.f32 %v53, %v156
  %v158 = vpop.f32.mrf.mxu0
  %159 = vmatprep.mubr.f32.mxu0 0.0
  %160 = vmatmul.mubr.f32.gmra.mxu0 %v66
  %v161 = vpop.f32.mrf.mxu0
  %v162 = vadd.f32 %v53, %v161
  %v163 = vpop.f32.mrf.mxu0
  %164 = vmatprep.mubr.f32.mxu0 0.0
  %165 = vmatmul.mubr.f32.gmra.mxu0 %v69
  %v166 = vpop.f32.mrf.mxu0
  %v167 = vadd.f32 %v53, %v166
  %v168 = vpop.f32.mrf.mxu0
  %169 = vmatprep.mubr.f32.mxu0 0.0
  %170 = vmatmul.mubr.f32.gmra.mxu0 %v72
  %v171 = vpop.f32.mrf.mxu0
  %v172 = vadd.f32 %v53, %v171
  %v173 = vpop.f32.mrf.mxu0
  %174 = vmatprep.mubr.f32.mxu0 0.0
  %175 = vmatmul.mubr.f32.gmra.mxu0 %v75
  %v176 = vpop.f32.mrf.mxu0
  %v177 = vadd.f32 %v53, %v176
  %v178 = vpop.f32.mrf.mxu0
  %179 = vmatprep.mubr.f32.mxu0 0.0
  %180 = vmatmul.mubr.f32.gmra.mxu0 %v78
  %v181 = vpop.f32.mrf.mxu0
  %v182 = vadd.f32 %v53, %v181
  %v183 = vpop.f32.mrf.mxu0
  %184 = vdwg.mxu0
  %185 = vst [vmem:[#allocation2] sm:$0xff] %v147
  %186 = vst [vmem:[#allocation2 + $0x8] sm:$0xff] %v152
  %187 = vst [vmem:[#allocation2 + $0x10] sm:$0xff] %v157
  %188 = vst [vmem:[#allocation2 + $0x18] sm:$0xff] %v162
  %189 = vst [vmem:[#allocation2 + $0x20] sm:$0xff] %v167
  %190 = vst [vmem:[#allocation2 + $0x28] sm:$0xff] %v172
  %191 = vst [vmem:[#allocation2 + $0x30] sm:$0xff] %v177
  %192 = vst [vmem:[#allocation2 + $0x38] sm:$0xff] %v182
  %v193 = vld [vmem:[%s2] sm:$0xff]
  %v194 = vld [vmem:[%s2 + $0x8] sm:$0xff]
  %v195 = vld [vmem:[%s2 + $0x10] sm:$0xff]
  %v196 = vld [vmem:[%s2 + $0x18] sm:$0xff]
  %v197 = vld [vmem:[#allocation2] sm:$0xff]
  %vm198 = vcmask 261120
  %v200 = vsel %vm198, 0.0, 0
  %202 = vmatprep.subr.mxu0 0.0
  %203 = vmatpush1.msra.mxu0 0.0
  %204 = vmatprep.subr.mxu0 0.0
  %205 = vmatpush1.msra.mxu0 0.0
  %206 = vmatprep.subr.mxu0 0.0
  %207 = vmatpush1.msra.mxu0 0.0
  %208 = vmatprep.subr.mxu0 0.0
  %209 = vmatpush1.msra.mxu0 0.0
  %210 = vmatprep.subr.mxu0 0.0
  %211 = vmatpush1.msra.mxu0 0.0
  %212 = vmatprep.subr.mxu0 0.0
  %213 = vmatpush1.msra.mxu0 0.0
  %214 = vmatprep.subr.mxu0 0.0
  %215 = vmatpush1.msra.mxu0 0.0
  %216 = vmatprep.subr.mxu0 0.0
  %217 = vmatpush1.msra.mxu0 0.0
  %218 = vmatprep.subr.mxu0 0.0
  %219 = vmatpush1.msra.mxu0 0.0
  %220 = vmatprep.subr.mxu0 0.0
  %221 = vmatpush1.msra.mxu0 0.0
  %222 = vmatprep.subr.mxu0 0.0
  %223 = vmatpush1.msra.mxu0 0.0
  %224 = vmatprep.subr.mxu0 0.0
  %225 = vmatpush1.msra.mxu0 0.0
  %226 = vmatprep.subr.mxu0 0.0
  %227 = vmatpush1.msra.mxu0 %v196
  %228 = vmatprep.subr.mxu0 0.0
  %229 = vmatpush1.msra.mxu0 %v195
  %230 = vmatprep.subr.mxu0 0.0
  %231 = vmatpush1.msra.mxu0 %v194
  %232 = vmatprep.subr.mxu0 0.0
  %233 = vmatpush1.msra.mxu0 %v193
  %234 = vmatprep.subr.mxu0 0.0
  %235 = vmatpush2.msra.mxu0 0.0
  %236 = vmatprep.subr.mxu0 0.0
  %237 = vmatpush2.msra.mxu0 0.0
  %238 = vmatprep.subr.mxu0 0.0
  %239 = vmatpush2.msra.mxu0 0.0
  %240 = vmatprep.subr.mxu0 0.0
  %241 = vmatpush2.msra.mxu0 0.0
  %242 = vmatprep.subr.mxu0 0.0
  %243 = vmatpush2.msra.mxu0 0.0
  %244 = vmatprep.subr.mxu0 0.0
  %245 = vmatpush2.msra.mxu0 0.0
  %246 = vmatprep.subr.mxu0 0.0
  %247 = vmatpush2.msra.mxu0 0.0
  %248 = vmatprep.subr.mxu0 0.0
  %249 = vmatpush2.msra.mxu0 0.0
  %250 = vmatprep.subr.mxu0 0.0
  %251 = vmatpush2.msra.mxu0 0.0
  %252 = vmatprep.subr.mxu0 0.0
  %253 = vmatpush2.msra.mxu0 0.0
  %254 = vmatprep.subr.mxu0 0.0
  %255 = vmatpush2.msra.mxu0 0.0
  %256 = vmatprep.subr.mxu0 0.0
  %257 = vmatpush2.msra.mxu0 0.0
  %258 = vmatprep.subr.mxu0 0.0
  %259 = vmatpush2.msra.mxu0 0.0
  %260 = vmatprep.subr.mxu0 0.0
  %261 = vmatpush2.msra.mxu0 0.0
  %262 = vmatprep.subr.mxu0 0.0
  %263 = vmatpush2.msra.mxu0 0.0
  %264 = vmatprep.subr.mxu0 0.0
  %265 = vmatpush2.msra.mxu0 0.0
  %266 = vmatprep.mubr.f32.mxu0 0.0
  %267 = vmatmul.mubr.f32.gmra.mxu0 %v200
  %v268 = vpop.f32.mrf.mxu0
  %v269 = vadd.f32 0.0, %v268
  %v270 = vpop.f32.mrf.mxu0
  %271 = vdwg.mxu0
  %v272 = vadd.f32 %v197, %v269
  %v273 = vmul.f32 %v272, %v37
  %v274 = vtanh.pop %v273
  %v275 = vadd.f32 %v274, 1.0
  %v276 = vmul.f32 %v275, 0.5
  %v277 = vsel %vm36, %v274, %v276
  %v278 = vmul.f32 %v277, 0.0
  %280 = vrot.lane.b32.xlu0 %v277, 64
  %v281 = vpop.permute.xlu0 %280
  %v283 = vmul.f32 %v277, %v281
  %285 = vrot.lane.b32.xlu0 %v283, 32
  %v286 = vpop.permute.xlu0 %285
  %v288 = vadd.f32 %v278, %v286
  %v289 = vtanh.pop %v288
  %291 = vrot.lane.b32.xlu0 %v289, 64
  %v292 = vpop.permute.xlu0 %291
  %v294 = vmul.f32 %v277, %v292
  %296 = vrot.lane.b32.xlu0 %v294, 32
  %v297 = vpop.permute.xlu0 %296
  %299 = vst.msk [vmem:[#allocation3] sm:$0xff] %vm198, %v297
  %v300 = vld [vmem:[#allocation2 + $0x8] sm:$0xff]
  %v301 = vsel %vm198, %v297, 0
  %303 = vmatprep.subr.mxu0 0.0
  %304 = vmatpush1.msra.mxu0 0.0
  %305 = vmatprep.subr.mxu0 0.0
  %306 = vmatpush1.msra.mxu0 0.0
  %307 = vmatprep.subr.mxu0 0.0
  %308 = vmatpush1.msra.mxu0 0.0
  %309 = vmatprep.subr.mxu0 0.0
  %310 = vmatpush1.msra.mxu0 0.0
  %311 = vmatprep.subr.mxu0 0.0
  %312 = vmatpush1.msra.mxu0 0.0
  %313 = vmatprep.subr.mxu0 0.0
  %314 = vmatpush1.msra.mxu0 0.0
  %315 = vmatprep.subr.mxu0 0.0
  %316 = vmatpush1.msra.mxu0 0.0
  %317 = vmatprep.subr.mxu0 0.0
  %318 = vmatpush1.msra.mxu0 0.0
  %319 = vmatprep.subr.mxu0 0.0
  %320 = vmatpush1.msra.mxu0 0.0
  %321 = vmatprep.subr.mxu0 0.0
  %322 = vmatpush1.msra.mxu0 0.0
  %323 = vmatprep.subr.mxu0 0.0
  %324 = vmatpush1.msra.mxu0 0.0
  %325 = vmatprep.subr.mxu0 0.0
  %326 = vmatpush1.msra.mxu0 0.0
  %327 = vmatprep.subr.mxu0 0.0
  %328 = vmatpush1.msra.mxu0 %v196
  %329 = vmatprep.subr.mxu0 0.0
  %330 = vmatpush1.msra.mxu0 %v195
  %331 = vmatprep.subr.mxu0 0.0
  %332 = vmatpush1.msra.mxu0 %v194
  %333 = vmatprep.subr.mxu0 0.0
  %334 = vmatpush1.msra.mxu0 %v193
  %335 = vmatprep.subr.mxu0 0.0
  %336 = vmatpush2.msra.mxu0 0.0
  %337 = vmatprep.subr.mxu0 0.0
  %338 = vmatpush2.msra.mxu0 0.0
  %339 = vmatprep.subr.mxu0 0.0
  %340 = vmatpush2.msra.mxu0 0.0
  %341 = vmatprep.subr.mxu0 0.0
  %342 = vmatpush2.msra.mxu0 0.0
  %343 = vmatprep.subr.mxu0 0.0
  %344 = vmatpush2.msra.mxu0 0.0
  %345 = vmatprep.subr.mxu0 0.0
  %346 = vmatpush2.msra.mxu0 0.0
  %347 = vmatprep.subr.mxu0 0.0
  %348 = vmatpush2.msra.mxu0 0.0
  %349 = vmatprep.subr.mxu0 0.0
  %350 = vmatpush2.msra.mxu0 0.0
  %351 = vmatprep.subr.mxu0 0.0
  %352 = vmatpush2.msra.mxu0 0.0
  %353 = vmatprep.subr.mxu0 0.0
  %354 = vmatpush2.msra.mxu0 0.0
  %355 = vmatprep.subr.mxu0 0.0
  %356 = vmatpush2.msra.mxu0 0.0
  %357 = vmatprep.subr.mxu0 0.0
  %358 = vmatpush2.msra.mxu0 0.0
  %359 = vmatprep.subr.mxu0 0.0
  %360 = vmatpush2.msra.mxu0 0.0
  %361 = vmatprep.subr.mxu0 0.0
  %362 = vmatpush2.msra.mxu0 0.0
  %363 = vmatprep.subr.mxu0 0.0
  %364 = vmatpush2.msra.mxu0 0.0
  %365 = vmatprep.subr.mxu0 0.0
  %366 = vmatpush2.msra.mxu0 0.0
  %367 = vmatprep.mubr.f32.mxu0 0.0
  %368 = vmatmul.mubr.f32.gmra.mxu0 %v301
  %v369 = vpop.f32.mrf.mxu0
  %v370 = vadd.f32 0.0, %v369
  %v371 = vpop.f32.mrf.mxu0
  %372 = vdwg.mxu0
  %v373 = vadd.f32 %v300, %v370
  %v374 = vmul.f32 %v373, %v37
  %v375 = vtanh.pop %v374
  %v376 = vadd.f32 %v375, 1.0
  %v377 = vmul.f32 %v376, 0.5
  %v378 = vsel %vm36, %v375, %v377
  %v379 = vmul.f32 %v378, %v288
  %381 = vrot.lane.b32.xlu0 %v378, 64
  %v382 = vpop.permute.xlu0 %381
  %v384 = vmul.f32 %v378, %v382
  %386 = vrot.lane.b32.xlu0 %v384, 32
  %v387 = vpop.permute.xlu0 %386
  %v389 = vadd.f32 %v379, %v387
  %v390 = vtanh.pop %v389
  %392 = vrot.lane.b32.xlu0 %v390, 64
  %v393 = vpop.permute.xlu0 %392
  %v395 = vmul.f32 %v378, %v393
  %397 = vrot.lane.b32.xlu0 %v395, 32
  %v398 = vpop.permute.xlu0 %397
  %400 = vst.msk [vmem:[#allocation3 + $0x8] sm:$0xff] %vm198, %v398
  %v401 = vld [vmem:[#allocation2 + $0x10] sm:$0xff]
  %v402 = vsel %vm198, %v398, 0
  %404 = vmatprep.subr.mxu0 0.0
  %405 = vmatpush1.msra.mxu0 0.0
  %406 = vmatprep.subr.mxu0 0.0
  %407 = vmatpush1.msra.mxu0 0.0
  %408 = vmatprep.subr.mxu0 0.0
  %409 = vmatpush1.msra.mxu0 0.0
  %410 = vmatprep.subr.mxu0 0.0
  %411 = vmatpush1.msra.mxu0 0.0
  %412 = vmatprep.subr.mxu0 0.0
  %413 = vmatpush1.msra.mxu0 0.0
  %414 = vmatprep.subr.mxu0 0.0
  %415 = vmatpush1.msra.mxu0 0.0
  %416 = vmatprep.subr.mxu0 0.0
  %417 = vmatpush1.msra.mxu0 0.0
  %418 = vmatprep.subr.mxu0 0.0
  %419 = vmatpush1.msra.mxu0 0.0
  %420 = vmatprep.subr.mxu0 0.0
  %421 = vmatpush1.msra.mxu0 0.0
  %422 = vmatprep.subr.mxu0 0.0
  %423 = vmatpush1.msra.mxu0 0.0
  %424 = vmatprep.subr.mxu0 0.0
  %425 = vmatpush1.msra.mxu0 0.0
  %426 = vmatprep.subr.mxu0 0.0
  %427 = vmatpush1.msra.mxu0 0.0
  %428 = vmatprep.subr.mxu0 0.0
  %429 = vmatpush1.msra.mxu0 %v196
  %430 = vmatprep.subr.mxu0 0.0
  %431 = vmatpush1.msra.mxu0 %v195
  %432 = vmatprep.subr.mxu0 0.0
  %433 = vmatpush1.msra.mxu0 %v194
  %434 = vmatprep.subr.mxu0 0.0
  %435 = vmatpush1.msra.mxu0 %v193
  %436 = vmatprep.subr.mxu0 0.0
  %437 = vmatpush2.msra.mxu0 0.0
  %438 = vmatprep.subr.mxu0 0.0
  %439 = vmatpush2.msra.mxu0 0.0
  %440 = vmatprep.subr.mxu0 0.0
  %441 = vmatpush2.msra.mxu0 0.0
  %442 = vmatprep.subr.mxu0 0.0
  %443 = vmatpush2.msra.mxu0 0.0
  %444 = vmatprep.subr.mxu0 0.0
  %445 = vmatpush2.msra.mxu0 0.0
  %446 = vmatprep.subr.mxu0 0.0
  %447 = vmatpush2.msra.mxu0 0.0
  %448 = vmatprep.subr.mxu0 0.0
  %449 = vmatpush2.msra.mxu0 0.0
  %450 = vmatprep.subr.mxu0 0.0
  %451 = vmatpush2.msra.mxu0 0.0
  %452 = vmatprep.subr.mxu0 0.0
  %453 = vmatpush2.msra.mxu0 0.0
  %454 = vmatprep.subr.mxu0 0.0
  %455 = vmatpush2.msra.mxu0 0.0
  %456 = vmatprep.subr.mxu0 0.0
  %457 = vmatpush2.msra.mxu0 0.0
  %458 = vmatprep.subr.mxu0 0.0
  %459 = vmatpush2.msra.mxu0 0.0
  %460 = vmatprep.subr.mxu0 0.0
  %461 = vmatpush2.msra.mxu0 0.0
  %462 = vmatprep.subr.mxu0 0.0
  %463 = vmatpush2.msra.mxu0 0.0
  %464 = vmatprep.subr.mxu0 0.0
  %465 = vmatpush2.msra.mxu0 0.0
  %466 = vmatprep.subr.mxu0 0.0
  %467 = vmatpush2.msra.mxu0 0.0
  %468 = vmatprep.mubr.f32.mxu0 0.0
  %469 = vmatmul.mubr.f32.gmra.mxu0 %v402
  %v470 = vpop.f32.mrf.mxu0
  %v471 = vadd.f32 0.0, %v470
  %v472 = vpop.f32.mrf.mxu0
  %473 = vdwg.mxu0
  %v474 = vadd.f32 %v401, %v471
  %v475 = vmul.f32 %v474, %v37
  %v476 = vtanh.pop %v475
  %v477 = vadd.f32 %v476, 1.0
  %v478 = vmul.f32 %v477, 0.5
  %v479 = vsel %vm36, %v476, %v478
  %v480 = vmul.f32 %v479, %v389
  %482 = vrot.lane.b32.xlu0 %v479, 64
  %v483 = vpop.permute.xlu0 %482
  %v485 = vmul.f32 %v479, %v483
  %487 = vrot.lane.b32.xlu0 %v485, 32
  %v488 = vpop.permute.xlu0 %487
  %v490 = vadd.f32 %v480, %v488
  %v491 = vtanh.pop %v490
  %493 = vrot.lane.b32.xlu0 %v491, 64
  %v494 = vpop.permute.xlu0 %493
  %v496 = vmul.f32 %v479, %v494
  %498 = vrot.lane.b32.xlu0 %v496, 32
  %v499 = vpop.permute.xlu0 %498
  %501 = vst.msk [vmem:[#allocation3 + $0x10] sm:$0xff] %vm198, %v499
  %v502 = vld [vmem:[#allocation2 + $0x18] sm:$0xff]
  %v503 = vsel %vm198, %v499, 0
  %505 = vmatprep.subr.mxu0 0.0
  %506 = vmatpush1.msra.mxu0 0.0
  %507 = vmatprep.subr.mxu0 0.0
  %508 = vmatpush1.msra.mxu0 0.0
  %509 = vmatprep.subr.mxu0 0.0
  %510 = vmatpush1.msra.mxu0 0.0
  %511 = vmatprep.subr.mxu0 0.0
  %512 = vmatpush1.msra.mxu0 0.0
  %513 = vmatprep.subr.mxu0 0.0
  %514 = vmatpush1.msra.mxu0 0.0
  %515 = vmatprep.subr.mxu0 0.0
  %516 = vmatpush1.msra.mxu0 0.0
  %517 = vmatprep.subr.mxu0 0.0
  %518 = vmatpush1.msra.mxu0 0.0
  %519 = vmatprep.subr.mxu0 0.0
  %520 = vmatpush1.msra.mxu0 0.0
  %521 = vmatprep.subr.mxu0 0.0
  %522 = vmatpush1.msra.mxu0 0.0
  %523 = vmatprep.subr.mxu0 0.0
  %524 = vmatpush1.msra.mxu0 0.0
  %525 = vmatprep.subr.mxu0 0.0
  %526 = vmatpush1.msra.mxu0 0.0
  %527 = vmatprep.subr.mxu0 0.0
  %528 = vmatpush1.msra.mxu0 0.0
  %529 = vmatprep.subr.mxu0 0.0
  %530 = vmatpush1.msra.mxu0 %v196
  %531 = vmatprep.subr.mxu0 0.0
  %532 = vmatpush1.msra.mxu0 %v195
  %533 = vmatprep.subr.mxu0 0.0
  %534 = vmatpush1.msra.mxu0 %v194
  %535 = vmatprep.subr.mxu0 0.0
  %536 = vmatpush1.msra.mxu0 %v193
  %537 = vmatprep.subr.mxu0 0.0
  %538 = vmatpush2.msra.mxu0 0.0
  %539 = vmatprep.subr.mxu0 0.0
  %540 = vmatpush2.msra.mxu0 0.0
  %541 = vmatprep.subr.mxu0 0.0
  %542 = vmatpush2.msra.mxu0 0.0
  %543 = vmatprep.subr.mxu0 0.0
  %544 = vmatpush2.msra.mxu0 0.0
  %545 = vmatprep.subr.mxu0 0.0
  %546 = vmatpush2.msra.mxu0 0.0
  %547 = vmatprep.subr.mxu0 0.0
  %548 = vmatpush2.msra.mxu0 0.0
  %549 = vmatprep.subr.mxu0 0.0
  %550 = vmatpush2.msra.mxu0 0.0
  %551 = vmatprep.subr.mxu0 0.0
  %552 = vmatpush2.msra.mxu0 0.0
  %553 = vmatprep.subr.mxu0 0.0
  %554 = vmatpush2.msra.mxu0 0.0
  %555 = vmatprep.subr.mxu0 0.0
  %556 = vmatpush2.msra.mxu0 0.0
  %557 = vmatprep.subr.mxu0 0.0
  %558 = vmatpush2.msra.mxu0 0.0
  %559 = vmatprep.subr.mxu0 0.0
  %560 = vmatpush2.msra.mxu0 0.0
  %561 = vmatprep.subr.mxu0 0.0
  %562 = vmatpush2.msra.mxu0 0.0
  %563 = vmatprep.subr.mxu0 0.0
  %564 = vmatpush2.msra.mxu0 0.0
  %565 = vmatprep.subr.mxu0 0.0
  %566 = vmatpush2.msra.mxu0 0.0
  %567 = vmatprep.subr.mxu0 0.0
  %568 = vmatpush2.msra.mxu0 0.0
  %569 = vmatprep.mubr.f32.mxu0 0.0
  %570 = vmatmul.mubr.f32.gmra.mxu0 %v503
  %v571 = vpop.f32.mrf.mxu0
  %v572 = vadd.f32 0.0, %v571
  %v573 = vpop.f32.mrf.mxu0
  %574 = vdwg.mxu0
  %v575 = vadd.f32 %v502, %v572
  %v576 = vmul.f32 %v575, %v37
  %v577 = vtanh.pop %v576
  %v578 = vadd.f32 %v577, 1.0
  %v579 = vmul.f32 %v578, 0.5
  %v580 = vsel %vm36, %v577, %v579
  %v581 = vmul.f32 %v580, %v490
  %583 = vrot.lane.b32.xlu0 %v580, 64
  %v584 = vpop.permute.xlu0 %583
  %v586 = vmul.f32 %v580, %v584
  %588 = vrot.lane.b32.xlu0 %v586, 32
  %v589 = vpop.permute.xlu0 %588
  %v591 = vadd.f32 %v581, %v589
  %v592 = vtanh.pop %v591
  %594 = vrot.lane.b32.xlu0 %v592, 64
  %v595 = vpop.permute.xlu0 %594
  %v597 = vmul.f32 %v580, %v595
  %599 = vrot.lane.b32.xlu0 %v597, 32
  %v600 = vpop.permute.xlu0 %599
  %602 = vst.msk [vmem:[#allocation3 + $0x18] sm:$0xff] %vm198, %v600
  %v603 = vld [vmem:[#allocation2 + $0x20] sm:$0xff]
  %v604 = vsel %vm198, %v600, 0
  %606 = vmatprep.subr.mxu0 0.0
  %607 = vmatpush1.msra.mxu0 0.0
  %608 = vmatprep.subr.mxu0 0.0
  %609 = vmatpush1.msra.mxu0 0.0
  %610 = vmatprep.subr.mxu0 0.0
  %611 = vmatpush1.msra.mxu0 0.0
  %612 = vmatprep.subr.mxu0 0.0
  %613 = vmatpush1.msra.mxu0 0.0
  %614 = vmatprep.subr.mxu0 0.0
  %615 = vmatpush1.msra.mxu0 0.0
  %616 = vmatprep.subr.mxu0 0.0
  %617 = vmatpush1.msra.mxu0 0.0
  %618 = vmatprep.subr.mxu0 0.0
  %619 = vmatpush1.msra.mxu0 0.0
  %620 = vmatprep.subr.mxu0 0.0
  %621 = vmatpush1.msra.mxu0 0.0
  %622 = vmatprep.subr.mxu0 0.0
  %623 = vmatpush1.msra.mxu0 0.0
  %624 = vmatprep.subr.mxu0 0.0
  %625 = vmatpush1.msra.mxu0 0.0
  %626 = vmatprep.subr.mxu0 0.0
  %627 = vmatpush1.msra.mxu0 0.0
  %628 = vmatprep.subr.mxu0 0.0
  %629 = vmatpush1.msra.mxu0 0.0
  %630 = vmatprep.subr.mxu0 0.0
  %631 = vmatpush1.msra.mxu0 %v196
  %632 = vmatprep.subr.mxu0 0.0
  %633 = vmatpush1.msra.mxu0 %v195
  %634 = vmatprep.subr.mxu0 0.0
  %635 = vmatpush1.msra.mxu0 %v194
  %636 = vmatprep.subr.mxu0 0.0
  %637 = vmatpush1.msra.mxu0 %v193
  %638 = vmatprep.subr.mxu0 0.0
  %639 = vmatpush2.msra.mxu0 0.0
  %640 = vmatprep.subr.mxu0 0.0
  %641 = vmatpush2.msra.mxu0 0.0
  %642 = vmatprep.subr.mxu0 0.0
  %643 = vmatpush2.msra.mxu0 0.0
  %644 = vmatprep.subr.mxu0 0.0
  %645 = vmatpush2.msra.mxu0 0.0
  %646 = vmatprep.subr.mxu0 0.0
  %647 = vmatpush2.msra.mxu0 0.0
  %648 = vmatprep.subr.mxu0 0.0
  %649 = vmatpush2.msra.mxu0 0.0
  %650 = vmatprep.subr.mxu0 0.0
  %651 = vmatpush2.msra.mxu0 0.0
  %652 = vmatprep.subr.mxu0 0.0
  %653 = vmatpush2.msra.mxu0 0.0
  %654 = vmatprep.subr.mxu0 0.0
  %655 = vmatpush2.msra.mxu0 0.0
  %656 = vmatprep.subr.mxu0 0.0
  %657 = vmatpush2.msra.mxu0 0.0
  %658 = vmatprep.subr.mxu0 0.0
  %659 = vmatpush2.msra.mxu0 0.0
  %660 = vmatprep.subr.mxu0 0.0
  %661 = vmatpush2.msra.mxu0 0.0
  %662 = vmatprep.subr.mxu0 0.0
  %663 = vmatpush2.msra.mxu0 0.0
  %664 = vmatprep.subr.mxu0 0.0
  %665 = vmatpush2.msra.mxu0 0.0
  %666 = vmatprep.subr.mxu0 0.0
  %667 = vmatpush2.msra.mxu0 0.0
  %668 = vmatprep.subr.mxu0 0.0
  %669 = vmatpush2.msra.mxu0 0.0
  %670 = vmatprep.mubr.f32.mxu0 0.0
  %671 = vmatmul.mubr.f32.gmra.mxu0 %v604
  %v672 = vpop.f32.mrf.mxu0
  %v673 = vadd.f32 0.0, %v672
  %v674 = vpop.f32.mrf.mxu0
  %675 = vdwg.mxu0
  %v676 = vadd.f32 %v603, %v673
  %v677 = vmul.f32 %v676, %v37
  %v678 = vtanh.pop %v677
  %v679 = vadd.f32 %v678, 1.0
  %v680 = vmul.f32 %v679, 0.5
  %v681 = vsel %vm36, %v678, %v680
  %v682 = vmul.f32 %v681, %v591
  %684 = vrot.lane.b32.xlu0 %v681, 64
  %v685 = vpop.permute.xlu0 %684
  %v687 = vmul.f32 %v681, %v685
  %689 = vrot.lane.b32.xlu0 %v687, 32
  %v690 = vpop.permute.xlu0 %689
  %v692 = vadd.f32 %v682, %v690
  %v693 = vtanh.pop %v692
  %695 = vrot.lane.b32.xlu0 %v693, 64
  %v696 = vpop.permute.xlu0 %695
  %v698 = vmul.f32 %v681, %v696
  %700 = vrot.lane.b32.xlu0 %v698, 32
  %v701 = vpop.permute.xlu0 %700
  %703 = vst.msk [vmem:[#allocation3 + $0x20] sm:$0xff] %vm198, %v701
  %v704 = vld [vmem:[#allocation2 + $0x28] sm:$0xff]
  %v705 = vsel %vm198, %v701, 0
  %707 = vmatprep.subr.mxu0 0.0
  %708 = vmatpush1.msra.mxu0 0.0
  %709 = vmatprep.subr.mxu0 0.0
  %710 = vmatpush1.msra.mxu0 0.0
  %711 = vmatprep.subr.mxu0 0.0
  %712 = vmatpush1.msra.mxu0 0.0
  %713 = vmatprep.subr.mxu0 0.0
  %714 = vmatpush1.msra.mxu0 0.0
  %715 = vmatprep.subr.mxu0 0.0
  %716 = vmatpush1.msra.mxu0 0.0
  %717 = vmatprep.subr.mxu0 0.0
  %718 = vmatpush1.msra.mxu0 0.0
  %719 = vmatprep.subr.mxu0 0.0
  %720 = vmatpush1.msra.mxu0 0.0
  %721 = vmatprep.subr.mxu0 0.0
  %722 = vmatpush1.msra.mxu0 0.0
  %723 = vmatprep.subr.mxu0 0.0
  %724 = vmatpush1.msra.mxu0 0.0
  %725 = vmatprep.subr.mxu0 0.0
  %726 = vmatpush1.msra.mxu0 0.0
  %727 = vmatprep.subr.mxu0 0.0
  %728 = vmatpush1.msra.mxu0 0.0
  %729 = vmatprep.subr.mxu0 0.0
  %730 = vmatpush1.msra.mxu0 0.0
  %731 = vmatprep.subr.mxu0 0.0
  %732 = vmatpush1.msra.mxu0 %v196
  %733 = vmatprep.subr.mxu0 0.0
  %734 = vmatpush1.msra.mxu0 %v195
  %735 = vmatprep.subr.mxu0 0.0
  %736 = vmatpush1.msra.mxu0 %v194
  %737 = vmatprep.subr.mxu0 0.0
  %738 = vmatpush1.msra.mxu0 %v193
  %739 = vmatprep.subr.mxu0 0.0
  %740 = vmatpush2.msra.mxu0 0.0
  %741 = vmatprep.subr.mxu0 0.0
  %742 = vmatpush2.msra.mxu0 0.0
  %743 = vmatprep.subr.mxu0 0.0
  %744 = vmatpush2.msra.mxu0 0.0
  %745 = vmatprep.subr.mxu0 0.0
  %746 = vmatpush2.msra.mxu0 0.0
  %747 = vmatprep.subr.mxu0 0.0
  %748 = vmatpush2.msra.mxu0 0.0
  %749 = vmatprep.subr.mxu0 0.0
  %750 = vmatpush2.msra.mxu0 0.0
  %751 = vmatprep.subr.mxu0 0.0
  %752 = vmatpush2.msra.mxu0 0.0
  %753 = vmatprep.subr.mxu0 0.0
  %754 = vmatpush2.msra.mxu0 0.0
  %755 = vmatprep.subr.mxu0 0.0
  %756 = vmatpush2.msra.mxu0 0.0
  %757 = vmatprep.subr.mxu0 0.0
  %758 = vmatpush2.msra.mxu0 0.0
  %759 = vmatprep.subr.mxu0 0.0
  %760 = vmatpush2.msra.mxu0 0.0
  %761 = vmatprep.subr.mxu0 0.0
  %762 = vmatpush2.msra.mxu0 0.0
  %763 = vmatprep.subr.mxu0 0.0
  %764 = vmatpush2.msra.mxu0 0.0
  %765 = vmatprep.subr.mxu0 0.0
  %766 = vmatpush2.msra.mxu0 0.0
  %767 = vmatprep.subr.mxu0 0.0
  %768 = vmatpush2.msra.mxu0 0.0
  %769 = vmatprep.subr.mxu0 0.0
  %770 = vmatpush2.msra.mxu0 0.0
  %771 = vmatprep.mubr.f32.mxu0 0.0
  %772 = vmatmul.mubr.f32.gmra.mxu0 %v705
  %v773 = vpop.f32.mrf.mxu0
  %v774 = vadd.f32 0.0, %v773
  %v775 = vpop.f32.mrf.mxu0
  %776 = vdwg.mxu0
  %v777 = vadd.f32 %v704, %v774
  %v778 = vmul.f32 %v777, %v37
  %v779 = vtanh.pop %v778
  %v780 = vadd.f32 %v779, 1.0
  %v781 = vmul.f32 %v780, 0.5
  %v782 = vsel %vm36, %v779, %v781
  %v783 = vmul.f32 %v782, %v692
  %785 = vrot.lane.b32.xlu0 %v782, 64
  %v786 = vpop.permute.xlu0 %785
  %v788 = vmul.f32 %v782, %v786
  %790 = vrot.lane.b32.xlu0 %v788, 32
  %v791 = vpop.permute.xlu0 %790
  %v793 = vadd.f32 %v783, %v791
  %v794 = vtanh.pop %v793
  %796 = vrot.lane.b32.xlu0 %v794, 64
  %v797 = vpop.permute.xlu0 %796
  %v799 = vmul.f32 %v782, %v797
  %801 = vrot.lane.b32.xlu0 %v799, 32
  %v802 = vpop.permute.xlu0 %801
  %804 = vst.msk [vmem:[#allocation3 + $0x28] sm:$0xff] %vm198, %v802
  %v805 = vld [vmem:[#allocation2 + $0x30] sm:$0xff]
  %v806 = vsel %vm198, %v802, 0
  %808 = vmatprep.subr.mxu0 0.0
  %809 = vmatpush1.msra.mxu0 0.0
  %810 = vmatprep.subr.mxu0 0.0
  %811 = vmatpush1.msra.mxu0 0.0
  %812 = vmatprep.subr.mxu0 0.0
  %813 = vmatpush1.msra.mxu0 0.0
  %814 = vmatprep.subr.mxu0 0.0
  %815 = vmatpush1.msra.mxu0 0.0
  %816 = vmatprep.subr.mxu0 0.0
  %817 = vmatpush1.msra.mxu0 0.0
  %818 = vmatprep.subr.mxu0 0.0
  %819 = vmatpush1.msra.mxu0 0.0
  %820 = vmatprep.subr.mxu0 0.0
  %821 = vmatpush1.msra.mxu0 0.0
  %822 = vmatprep.subr.mxu0 0.0
  %823 = vmatpush1.msra.mxu0 0.0
  %824 = vmatprep.subr.mxu0 0.0
  %825 = vmatpush1.msra.mxu0 0.0
  %826 = vmatprep.subr.mxu0 0.0
  %827 = vmatpush1.msra.mxu0 0.0
  %828 = vmatprep.subr.mxu0 0.0
  %829 = vmatpush1.msra.mxu0 0.0
  %830 = vmatprep.subr.mxu0 0.0
  %831 = vmatpush1.msra.mxu0 0.0
  %832 = vmatprep.subr.mxu0 0.0
  %833 = vmatpush1.msra.mxu0 %v196
  %834 = vmatprep.subr.mxu0 0.0
  %835 = vmatpush1.msra.mxu0 %v195
  %836 = vmatprep.subr.mxu0 0.0
  %837 = vmatpush1.msra.mxu0 %v194
  %838 = vmatprep.subr.mxu0 0.0
  %839 = vmatpush1.msra.mxu0 %v193
  %840 = vmatprep.subr.mxu0 0.0
  %841 = vmatpush2.msra.mxu0 0.0
  %842 = vmatprep.subr.mxu0 0.0
  %843 = vmatpush2.msra.mxu0 0.0
  %844 = vmatprep.subr.mxu0 0.0
  %845 = vmatpush2.msra.mxu0 0.0
  %846 = vmatprep.subr.mxu0 0.0
  %847 = vmatpush2.msra.mxu0 0.0
  %848 = vmatprep.subr.mxu0 0.0
  %849 = vmatpush2.msra.mxu0 0.0
  %850 = vmatprep.subr.mxu0 0.0
  %851 = vmatpush2.msra.mxu0 0.0
  %852 = vmatprep.subr.mxu0 0.0
  %853 = vmatpush2.msra.mxu0 0.0
  %854 = vmatprep.subr.mxu0 0.0
  %855 = vmatpush2.msra.mxu0 0.0
  %856 = vmatprep.subr.mxu0 0.0
  %857 = vmatpush2.msra.mxu0 0.0
  %858 = vmatprep.subr.mxu0 0.0
  %859 = vmatpush2.msra.mxu0 0.0
  %860 = vmatprep.subr.mxu0 0.0
  %861 = vmatpush2.msra.mxu0 0.0
  %862 = vmatprep.subr.mxu0 0.0
  %863 = vmatpush2.msra.mxu0 0.0
  %864 = vmatprep.subr.mxu0 0.0
  %865 = vmatpush2.msra.mxu0 0.0
  %866 = vmatprep.subr.mxu0 0.0
  %867 = vmatpush2.msra.mxu0 0.0
  %868 = vmatprep.subr.mxu0 0.0
  %869 = vmatpush2.msra.mxu0 0.0
  %870 = vmatprep.subr.mxu0 0.0
  %871 = vmatpush2.msra.mxu0 0.0
  %872 = vmatprep.mubr.f32.mxu0 0.0
  %873 = vmatmul.mubr.f32.gmra.mxu0 %v806
  %v874 = vpop.f32.mrf.mxu0
  %v875 = vadd.f32 0.0, %v874
  %v876 = vpop.f32.mrf.mxu0
  %877 = vdwg.mxu0
  %v878 = vadd.f32 %v805, %v875
  %v879 = vmul.f32 %v878, %v37
  %v880 = vtanh.pop %v879
  %v881 = vadd.f32 %v880, 1.0
  %v882 = vmul.f32 %v881, 0.5
  %v883 = vsel %vm36, %v880, %v882
  %v884 = vmul.f32 %v883, %v793
  %886 = vrot.lane.b32.xlu0 %v883, 64
  %v887 = vpop.permute.xlu0 %886
  %v889 = vmul.f32 %v883, %v887
  %891 = vrot.lane.b32.xlu0 %v889, 32
  %v892 = vpop.permute.xlu0 %891
  %v894 = vadd.f32 %v884, %v892
  %v895 = vtanh.pop %v894
  %897 = vrot.lane.b32.xlu0 %v895, 64
  %v898 = vpop.permute.xlu0 %897
  %v900 = vmul.f32 %v883, %v898
  %902 = vrot.lane.b32.xlu0 %v900, 32
  %v903 = vpop.permute.xlu0 %902
  %905 = vst.msk [vmem:[#allocation3 + $0x30] sm:$0xff] %vm198, %v903
  %v906 = vld [vmem:[#allocation2 + $0x38] sm:$0xff]
  %v907 = vsel %vm198, %v903, 0
  %909 = vmatprep.subr.mxu0 0.0
  %910 = vmatpush1.msra.mxu0 0.0
  %911 = vmatprep.subr.mxu0 0.0
  %912 = vmatpush1.msra.mxu0 0.0
  %913 = vmatprep.subr.mxu0 0.0
  %914 = vmatpush1.msra.mxu0 0.0
  %915 = vmatprep.subr.mxu0 0.0
  %916 = vmatpush1.msra.mxu0 0.0
  %917 = vmatprep.subr.mxu0 0.0
  %918 = vmatpush1.msra.mxu0 0.0
  %919 = vmatprep.subr.mxu0 0.0
  %920 = vmatpush1.msra.mxu0 0.0
  %921 = vmatprep.subr.mxu0 0.0
  %922 = vmatpush1.msra.mxu0 0.0
  %923 = vmatprep.subr.mxu0 0.0
  %924 = vmatpush1.msra.mxu0 0.0
  %925 = vmatprep.subr.mxu0 0.0
  %926 = vmatpush1.msra.mxu0 0.0
  %927 = vmatprep.subr.mxu0 0.0
  %928 = vmatpush1.msra.mxu0 0.0
  %929 = vmatprep.subr.mxu0 0.0
  %930 = vmatpush1.msra.mxu0 0.0
  %931 = vmatprep.subr.mxu0 0.0
  %932 = vmatpush1.msra.mxu0 0.0
  %933 = vmatprep.subr.mxu0 0.0
  %934 = vmatpush1.msra.mxu0 %v196
  %935 = vmatprep.subr.mxu0 0.0
  %936 = vmatpush1.msra.mxu0 %v195
  %937 = vmatprep.subr.mxu0 0.0
  %938 = vmatpush1.msra.mxu0 %v194
  %939 = vmatprep.subr.mxu0 0.0
  %940 = vmatpush1.msra.mxu0 %v193
  %941 = vmatprep.subr.mxu0 0.0
  %942 = vmatpush2.msra.mxu0 0.0
  %943 = vmatprep.subr.mxu0 0.0
  %944 = vmatpush2.msra.mxu0 0.0
  %945 = vmatprep.subr.mxu0 0.0
  %946 = vmatpush2.msra.mxu0 0.0
  %947 = vmatprep.subr.mxu0 0.0
  %948 = vmatpush2.msra.mxu0 0.0
  %949 = vmatprep.subr.mxu0 0.0
  %950 = vmatpush2.msra.mxu0 0.0
  %951 = vmatprep.subr.mxu0 0.0
  %952 = vmatpush2.msra.mxu0 0.0
  %953 = vmatprep.subr.mxu0 0.0
  %954 = vmatpush2.msra.mxu0 0.0
  %955 = vmatprep.subr.mxu0 0.0
  %956 = vmatpush2.msra.mxu0 0.0
  %957 = vmatprep.subr.mxu0 0.0
  %958 = vmatpush2.msra.mxu0 0.0
  %959 = vmatprep.subr.mxu0 0.0
  %960 = vmatpush2.msra.mxu0 0.0
  %961 = vmatprep.subr.mxu0 0.0
  %962 = vmatpush2.msra.mxu0 0.0
  %963 = vmatprep.subr.mxu0 0.0
  %964 = vmatpush2.msra.mxu0 0.0
  %965 = vmatprep.subr.mxu0 0.0
  %966 = vmatpush2.msra.mxu0 0.0
  %967 = vmatprep.subr.mxu0 0.0
  %968 = vmatpush2.msra.mxu0 0.0
  %969 = vmatprep.subr.mxu0 0.0
  %970 = vmatpush2.msra.mxu0 0.0
  %971 = vmatprep.subr.mxu0 0.0
  %972 = vmatpush2.msra.mxu0 0.0
  %973 = vmatprep.mubr.f32.mxu0 0.0
  %974 = vmatmul.mubr.f32.gmra.mxu0 %v907
  %v975 = vpop.f32.mrf.mxu0
  %v976 = vadd.f32 0.0, %v975
  %v977 = vpop.f32.mrf.mxu0
  %978 = vdwg.mxu0
  %v979 = vadd.f32 %v906, %v976
  %v980 = vmul.f32 %v979, %v37
  %v981 = vtanh.pop %v980
  %v982 = vadd.f32 %v981, 1.0
  %v983 = vmul.f32 %v982, 0.5
  %v984 = vsel %vm36, %v981, %v983
  %v985 = vmul.f32 %v984, %v894
  %987 = vrot.lane.b32.xlu0 %v984, 64
  %v988 = vpop.permute.xlu0 %987
  %v990 = vmul.f32 %v984, %v988
  %992 = vrot.lane.b32.xlu0 %v990, 32
  %v993 = vpop.permute.xlu0 %992
  %v995 = vadd.f32 %v985, %v993
  %v996 = vtanh.pop %v995
  %998 = vrot.lane.b32.xlu0 %v996, 64
  %v999 = vpop.permute.xlu0 %998
  %v1001 = vmul.f32 %v984, %v999
  %1003 = vrot.lane.b32.xlu0 %v1001, 32
  %v1004 = vpop.permute.xlu0 %1003
  %1006 = vst.msk [vmem:[#allocation3 + $0x38] sm:$0xff] %vm198, %v1004
  %v1007 = vld [vmem:[#allocation3] sm:$0xff]
  %v1008 = vld [vmem:[#allocation3 + $0x8] sm:$0xff]
  %v1009 = vld [vmem:[#allocation3 + $0x10] sm:$0xff]
  %v1010 = vld [vmem:[#allocation3 + $0x18] sm:$0xff]
  %v1011 = vld [vmem:[#allocation3 + $0x20] sm:$0xff]
  %v1012 = vld [vmem:[#allocation3 + $0x28] sm:$0xff]
  %v1013 = vld [vmem:[#allocation3 + $0x30] sm:$0xff]
  %v1014 = vld [vmem:[#allocation3 + $0x38] sm:$0xff]
  %v1015 = vld [vmem:[%s4] sm:$0xff]
  %v1016 = vld [vmem:[%s4 + $0x8] sm:$0xff]
  %v1017 = vld [vmem:[%s4 + $0x10] sm:$0xff]
  %v1018 = vld [vmem:[%s4 + $0x18] sm:$0xff]
  %v1019 = vld [vmem:[%s6] sm:$0x1]
  %v1021 = vlaneseq
  %v1022 = vshrl.u32 %v1021, 7
  %v1023 = vsub.s32 0, %v1022
  %v1024 = vrot.slane %v1019, %v1023
  %v1027 = vsel %vm198, %v1007, 0
  %v1030 = vsel %vm198, %v1008, 0
  %v1033 = vsel %vm198, %v1009, 0
  %v1036 = vsel %vm198, %v1010, 0
  %v1039 = vsel %vm198, %v1011, 0
  %v1042 = vsel %vm198, %v1012, 0
  %v1045 = vsel %vm198, %v1013, 0
  %v1048 = vsel %vm198, %v1014, 0
  %1050 = vmatprep.subr.mxu0 0.0
  %1051 = vmatpush1.msra.mxu0 0.0
  %1052 = vmatprep.subr.mxu0 0.0
  %1053 = vmatpush1.msra.mxu0 0.0
  %1054 = vmatprep.subr.mxu0 0.0
  %1055 = vmatpush1.msra.mxu0 0.0
  %1056 = vmatprep.subr.mxu0 0.0
  %1057 = vmatpush1.msra.mxu0 0.0
  %1058 = vmatprep.subr.mxu0 0.0
  %1059 = vmatpush1.msra.mxu0 0.0
  %1060 = vmatprep.subr.mxu0 0.0
  %1061 = vmatpush1.msra.mxu0 0.0
  %1062 = vmatprep.subr.mxu0 0.0
  %1063 = vmatpush1.msra.mxu0 0.0
  %1064 = vmatprep.subr.mxu0 0.0
  %1065 = vmatpush1.msra.mxu0 0.0
  %1066 = vmatprep.subr.mxu0 0.0
  %1067 = vmatpush1.msra.mxu0 0.0
  %1068 = vmatprep.subr.mxu0 0.0
  %1069 = vmatpush1.msra.mxu0 0.0
  %1070 = vmatprep.subr.mxu0 0.0
  %1071 = vmatpush1.msra.mxu0 0.0
  %1072 = vmatprep.subr.mxu0 0.0
  %1073 = vmatpush1.msra.mxu0 0.0
  %1074 = vmatprep.subr.mxu0 0.0
  %1075 = vmatpush1.msra.mxu0 %v1018
  %1076 = vmatprep.subr.mxu0 0.0
  %1077 = vmatpush1.msra.mxu0 %v1017
  %1078 = vmatprep.subr.mxu0 0.0
  %1079 = vmatpush1.msra.mxu0 %v1016
  %1080 = vmatprep.subr.mxu0 0.0
  %1081 = vmatpush1.msra.mxu0 %v1015
  %1082 = vmatprep.subr.mxu0 0.0
  %1083 = vmatpush2.msra.mxu0 0.0
  %1084 = vmatprep.subr.mxu0 0.0
  %1085 = vmatpush2.msra.mxu0 0.0
  %1086 = vmatprep.subr.mxu0 0.0
  %1087 = vmatpush2.msra.mxu0 0.0
  %1088 = vmatprep.subr.mxu0 0.0
  %1089 = vmatpush2.msra.mxu0 0.0
  %1090 = vmatprep.subr.mxu0 0.0
  %1091 = vmatpush2.msra.mxu0 0.0
  %1092 = vmatprep.subr.mxu0 0.0
  %1093 = vmatpush2.msra.mxu0 0.0
  %1094 = vmatprep.subr.mxu0 0.0
  %1095 = vmatpush2.msra.mxu0 0.0
  %1096 = vmatprep.subr.mxu0 0.0
  %1097 = vmatpush2.msra.mxu0 0.0
  %1098 = vmatprep.subr.mxu0 0.0
  %1099 = vmatpush2.msra.mxu0 0.0
  %1100 = vmatprep.subr.mxu0 0.0
  %1101 = vmatpush2.msra.mxu0 0.0
  %1102 = vmatprep.subr.mxu0 0.0
  %1103 = vmatpush2.msra.mxu0 0.0
  %1104 = vmatprep.subr.mxu0 0.0
  %1105 = vmatpush2.msra.mxu0 0.0
  %1106 = vmatprep.subr.mxu0 0.0
  %1107 = vmatpush2.msra.mxu0 0.0
  %1108 = vmatprep.subr.mxu0 0.0
  %1109 = vmatpush2.msra.mxu0 0.0
  %1110 = vmatprep.subr.mxu0 0.0
  %1111 = vmatpush2.msra.mxu0 0.0
  %1112 = vmatprep.subr.mxu0 0.0
  %1113 = vmatpush2.msra.mxu0 0.0
  %1114 = vmatprep.mubr.f32.mxu0 0.0
  %1115 = vmatmul.mubr.f32.gmra.mxu0 %v1027
  %v1116 = vpop.f32.mrf.mxu0
  %v1117 = vadd.f32 %v1024, %v1116
  %v1118 = vpop.f32.mrf.mxu0
  %1119 = vmatprep.mubr.f32.mxu0 0.0
  %1120 = vmatmul.mubr.f32.gmra.mxu0 %v1030
  %v1121 = vpop.f32.mrf.mxu0
  %v1122 = vadd.f32 %v1024, %v1121
  %v1123 = vpop.f32.mrf.mxu0
  %1124 = vmatprep.mubr.f32.mxu0 0.0
  %1125 = vmatmul.mubr.f32.gmra.mxu0 %v1033
  %v1126 = vpop.f32.mrf.mxu0
  %v1127 = vadd.f32 %v1024, %v1126
  %v1128 = vpop.f32.mrf.mxu0
  %1129 = vmatprep.mubr.f32.mxu0 0.0
  %1130 = vmatmul.mubr.f32.gmra.mxu0 %v1036
  %v1131 = vpop.f32.mrf.mxu0
  %v1132 = vadd.f32 %v1024, %v1131
  %v1133 = vpop.f32.mrf.mxu0
  %1134 = vmatprep.mubr.f32.mxu0 0.0
  %1135 = vmatmul.mubr.f32.gmra.mxu0 %v1039
  %v1136 = vpop.f32.mrf.mxu0
  %v1137 = vadd.f32 %v1024, %v1136
  %v1138 = vpop.f32.mrf.mxu0
  %1139 = vmatprep.mubr.f32.mxu0 0.0
  %1140 = vmatmul.mubr.f32.gmra.mxu0 %v1042
  %v1141 = vpop.f32.mrf.mxu0
  %v1142 = vadd.f32 %v1024, %v1141
  %v1143 = vpop.f32.mrf.mxu0
  %1144 = vmatprep.mubr.f32.mxu0 0.0
  %1145 = vmatmul.mubr.f32.gmra.mxu0 %v1045
  %v1146 = vpop.f32.mrf.mxu0
  %v1147 = vadd.f32 %v1024, %v1146
  %v1148 = vpop.f32.mrf.mxu0
  %1149 = vmatprep.mubr.f32.mxu0 0.0
  %1150 = vmatmul.mubr.f32.gmra.mxu0 %v1048
  %v1151 = vpop.f32.mrf.mxu0
  %v1152 = vadd.f32 %v1024, %v1151
  %v1153 = vpop.f32.mrf.mxu0
  %1154 = vdwg.mxu0
  %1155 = vst [vmem:[#allocation2] sm:$0xff] %v1117
  %1156 = vst [vmem:[#allocation2 + $0x8] sm:$0xff] %v1122
  %1157 = vst [vmem:[#allocation2 + $0x10] sm:$0xff] %v1127
  %1158 = vst [vmem:[#allocation2 + $0x18] sm:$0xff] %v1132
  %1159 = vst [vmem:[#allocation2 + $0x20] sm:$0xff] %v1137
  %1160 = vst [vmem:[#allocation2 + $0x28] sm:$0xff] %v1142
  %1161 = vst [vmem:[#allocation2 + $0x30] sm:$0xff] %v1147
  %1162 = vst [vmem:[#allocation2 + $0x38] sm:$0xff] %v1152
  %v1163 = vld [vmem:[%s5] sm:$0xff]
  %v1164 = vld [vmem:[%s5 + $0x8] sm:$0xff]
  %v1165 = vld [vmem:[%s5 + $0x10] sm:$0xff]
  %v1166 = vld [vmem:[%s5 + $0x18] sm:$0xff]
  %v1167 = vld [vmem:[#allocation2] sm:$0xff]
  %1168 = vmatprep.subr.mxu0 0.0
  %1169 = vmatpush1.msra.mxu0 0.0
  %1170 = vmatprep.subr.mxu0 0.0
  %1171 = vmatpush1.msra.mxu0 0.0
  %1172 = vmatprep.subr.mxu0 0.0
  %1173 = vmatpush1.msra.mxu0 0.0
  %1174 = vmatprep.subr.mxu0 0.0
  %1175 = vmatpush1.msra.mxu0 0.0
  %1176 = vmatprep.subr.mxu0 0.0
  %1177 = vmatpush1.msra.mxu0 0.0
  %1178 = vmatprep.subr.mxu0 0.0
  %1179 = vmatpush1.msra.mxu0 0.0
  %1180 = vmatprep.subr.mxu0 0.0
  %1181 = vmatpush1.msra.mxu0 0.0
  %1182 = vmatprep.subr.mxu0 0.0
  %1183 = vmatpush1.msra.mxu0 0.0
  %1184 = vmatprep.subr.mxu0 0.0
  %1185 = vmatpush1.msra.mxu0 0.0
  %1186 = vmatprep.subr.mxu0 0.0
  %1187 = vmatpush1.msra.mxu0 0.0
  %1188 = vmatprep.subr.mxu0 0.0
  %1189 = vmatpush1.msra.mxu0 0.0
  %1190 = vmatprep.subr.mxu0 0.0
  %1191 = vmatpush1.msra.mxu0 0.0
  %1192 = vmatprep.subr.mxu0 0.0
  %1193 = vmatpush1.msra.mxu0 %v1166
  %1194 = vmatprep.subr.mxu0 0.0
  %1195 = vmatpush1.msra.mxu0 %v1165
  %1196 = vmatprep.subr.mxu0 0.0
  %1197 = vmatpush1.msra.mxu0 %v1164
  %1198 = vmatprep.subr.mxu0 0.0
  %1199 = vmatpush1.msra.mxu0 %v1163
  %1200 = vmatprep.subr.mxu0 0.0
  %1201 = vmatpush2.msra.mxu0 0.0
  %1202 = vmatprep.subr.mxu0 0.0
  %1203 = vmatpush2.msra.mxu0 0.0
  %1204 = vmatprep.subr.mxu0 0.0
  %1205 = vmatpush2.msra.mxu0 0.0
  %1206 = vmatprep.subr.mxu0 0.0
  %1207 = vmatpush2.msra.mxu0 0.0
  %1208 = vmatprep.subr.mxu0 0.0
  %1209 = vmatpush2.msra.mxu0 0.0
  %1210 = vmatprep.subr.mxu0 0.0
  %1211 = vmatpush2.msra.mxu0 0.0
  %1212 = vmatprep.subr.mxu0 0.0
  %1213 = vmatpush2.msra.mxu0 0.0
  %1214 = vmatprep.subr.mxu0 0.0
  %1215 = vmatpush2.msra.mxu0 0.0
  %1216 = vmatprep.subr.mxu0 0.0
  %1217 = vmatpush2.msra.mxu0 0.0
  %1218 = vmatprep.subr.mxu0 0.0
  %1219 = vmatpush2.msra.mxu0 0.0
  %1220 = vmatprep.subr.mxu0 0.0
  %1221 = vmatpush2.msra.mxu0 0.0
  %1222 = vmatprep.subr.mxu0 0.0
  %1223 = vmatpush2.msra.mxu0 0.0
  %1224 = vmatprep.subr.mxu0 0.0
  %1225 = vmatpush2.msra.mxu0 0.0
  %1226 = vmatprep.subr.mxu0 0.0
  %1227 = vmatpush2.msra.mxu0 0.0
  %1228 = vmatprep.subr.mxu0 0.0
  %1229 = vmatpush2.msra.mxu0 0.0
  %1230 = vmatprep.subr.mxu0 0.0
  %1231 = vmatpush2.msra.mxu0 0.0
  %1232 = vmatprep.mubr.f32.mxu0 0.0
  %1233 = vmatmul.mubr.f32.gmra.mxu0 %v200
  %v1234 = vpop.f32.mrf.mxu0
  %v1235 = vadd.f32 0.0, %v1234
  %v1236 = vpop.f32.mrf.mxu0
  %1237 = vdwg.mxu0
  %v1238 = vadd.f32 %v1167, %v1235
  %v1239 = vmul.f32 %v1238, %v37
  %v1240 = vtanh.pop %v1239
  %v1241 = vadd.f32 %v1240, 1.0
  %v1242 = vmul.f32 %v1241, 0.5
  %v1243 = vsel %vm36, %v1240, %v1242
  %v1244 = vmul.f32 %v1243, 0.0
  %1246 = vrot.lane.b32.xlu0 %v1243, 64
  %v1247 = vpop.permute.xlu0 %1246
  %v1249 = vmul.f32 %v1243, %v1247
  %1251 = vrot.lane.b32.xlu0 %v1249, 32
  %v1252 = vpop.permute.xlu0 %1251
  %v1254 = vadd.f32 %v1244, %v1252
  %v1255 = vtanh.pop %v1254
  %1257 = vrot.lane.b32.xlu0 %v1255, 64
  %v1258 = vpop.permute.xlu0 %1257
  %v1260 = vmul.f32 %v1243, %v1258
  %1262 = vrot.lane.b32.xlu0 %v1260, 32
  %v1263 = vpop.permute.xlu0 %1262
  %1265 = vst.msk [vmem:[#allocation3] sm:$0xff] %vm198, %v1263
  %v1266 = vld [vmem:[#allocation2 + $0x8] sm:$0xff]
  %v1267 = vsel %vm198, %v1263, 0
  %1269 = vmatprep.subr.mxu0 0.0
  %1270 = vmatpush1.msra.mxu0 0.0
  %1271 = vmatprep.subr.mxu0 0.0
  %1272 = vmatpush1.msra.mxu0 0.0
  %1273 = vmatprep.subr.mxu0 0.0
  %1274 = vmatpush1.msra.mxu0 0.0
  %1275 = vmatprep.subr.mxu0 0.0
  %1276 = vmatpush1.msra.mxu0 0.0
  %1277 = vmatprep.subr.mxu0 0.0
  %1278 = vmatpush1.msra.mxu0 0.0
  %1279 = vmatprep.subr.mxu0 0.0
  %1280 = vmatpush1.msra.mxu0 0.0
  %1281 = vmatprep.subr.mxu0 0.0
  %1282 = vmatpush1.msra.mxu0 0.0
  %1283 = vmatprep.subr.mxu0 0.0
  %1284 = vmatpush1.msra.mxu0 0.0
  %1285 = vmatprep.subr.mxu0 0.0
  %1286 = vmatpush1.msra.mxu0 0.0
  %1287 = vmatprep.subr.mxu0 0.0
  %1288 = vmatpush1.msra.mxu0 0.0
  %1289 = vmatprep.subr.mxu0 0.0
  %1290 = vmatpush1.msra.mxu0 0.0
  %1291 = vmatprep.subr.mxu0 0.0
  %1292 = vmatpush1.msra.mxu0 0.0
  %1293 = vmatprep.subr.mxu0 0.0
  %1294 = vmatpush1.msra.mxu0 %v1166
  %1295 = vmatprep.subr.mxu0 0.0
  %1296 = vmatpush1.msra.mxu0 %v1165
  %1297 = vmatprep.subr.mxu0 0.0
  %1298 = vmatpush1.msra.mxu0 %v1164
  %1299 = vmatprep.subr.mxu0 0.0
  %1300 = vmatpush1.msra.mxu0 %v1163
  %1301 = vmatprep.subr.mxu0 0.0
  %1302 = vmatpush2.msra.mxu0 0.0
  %1303 = vmatprep.subr.mxu0 0.0
  %1304 = vmatpush2.msra.mxu0 0.0
  %1305 = vmatprep.subr.mxu0 0.0
  %1306 = vmatpush2.msra.mxu0 0.0
  %1307 = vmatprep.subr.mxu0 0.0
  %1308 = vmatpush2.msra.mxu0 0.0
  %1309 = vmatprep.subr.mxu0 0.0
  %1310 = vmatpush2.msra.mxu0 0.0
  %1311 = vmatprep.subr.mxu0 0.0
  %1312 = vmatpush2.msra.mxu0 0.0
  %1313 = vmatprep.subr.mxu0 0.0
  %1314 = vmatpush2.msra.mxu0 0.0
  %1315 = vmatprep.subr.mxu0 0.0
  %1316 = vmatpush2.msra.mxu0 0.0
  %1317 = vmatprep.subr.mxu0 0.0
  %1318 = vmatpush2.msra.mxu0 0.0
  %1319 = vmatprep.subr.mxu0 0.0
  %1320 = vmatpush2.msra.mxu0 0.0
  %1321 = vmatprep.subr.mxu0 0.0
  %1322 = vmatpush2.msra.mxu0 0.0
  %1323 = vmatprep.subr.mxu0 0.0
  %1324 = vmatpush2.msra.mxu0 0.0
  %1325 = vmatprep.subr.mxu0 0.0
  %1326 = vmatpush2.msra.mxu0 0.0
  %1327 = vmatprep.subr.mxu0 0.0
  %1328 = vmatpush2.msra.mxu0 0.0
  %1329 = vmatprep.subr.mxu0 0.0
  %1330 = vmatpush2.msra.mxu0 0.0
  %1331 = vmatprep.subr.mxu0 0.0
  %1332 = vmatpush2.msra.mxu0 0.0
  %1333 = vmatprep.mubr.f32.mxu0 0.0
  %1334 = vmatmul.mubr.f32.gmra.mxu0 %v1267
  %v1335 = vpop.f32.mrf.mxu0
  %v1336 = vadd.f32 0.0, %v1335
  %v1337 = vpop.f32.mrf.mxu0
  %1338 = vdwg.mxu0
  %v1339 = vadd.f32 %v1266, %v1336
  %v1340 = vmul.f32 %v1339, %v37
  %v1341 = vtanh.pop %v1340
  %v1342 = vadd.f32 %v1341, 1.0
  %v1343 = vmul.f32 %v1342, 0.5
  %v1344 = vsel %vm36, %v1341, %v1343
  %v1345 = vmul.f32 %v1344, %v1254
  %1347 = vrot.lane.b32.xlu0 %v1344, 64
  %v1348 = vpop.permute.xlu0 %1347
  %v1350 = vmul.f32 %v1344, %v1348
  %1352 = vrot.lane.b32.xlu0 %v1350, 32
  %v1353 = vpop.permute.xlu0 %1352
  %v1355 = vadd.f32 %v1345, %v1353
  %v1356 = vtanh.pop %v1355
  %1358 = vrot.lane.b32.xlu0 %v1356, 64
  %v1359 = vpop.permute.xlu0 %1358
  %v1361 = vmul.f32 %v1344, %v1359
  %1363 = vrot.lane.b32.xlu0 %v1361, 32
  %v1364 = vpop.permute.xlu0 %1363
  %1366 = vst.msk [vmem:[#allocation3 + $0x8] sm:$0xff] %vm198, %v1364
  %v1367 = vld [vmem:[#allocation2 + $0x10] sm:$0xff]
  %v1368 = vsel %vm198, %v1364, 0
  %1370 = vmatprep.subr.mxu0 0.0
  %1371 = vmatpush1.msra.mxu0 0.0
  %1372 = vmatprep.subr.mxu0 0.0
  %1373 = vmatpush1.msra.mxu0 0.0
  %1374 = vmatprep.subr.mxu0 0.0
  %1375 = vmatpush1.msra.mxu0 0.0
  %1376 = vmatprep.subr.mxu0 0.0
  %1377 = vmatpush1.msra.mxu0 0.0
  %1378 = vmatprep.subr.mxu0 0.0
  %1379 = vmatpush1.msra.mxu0 0.0
  %1380 = vmatprep.subr.mxu0 0.0
  %1381 = vmatpush1.msra.mxu0 0.0
  %1382 = vmatprep.subr.mxu0 0.0
  %1383 = vmatpush1.msra.mxu0 0.0
  %1384 = vmatprep.subr.mxu0 0.0
  %1385 = vmatpush1.msra.mxu0 0.0
  %1386 = vmatprep.subr.mxu0 0.0
  %1387 = vmatpush1.msra.mxu0 0.0
  %1388 = vmatprep.subr.mxu0 0.0
  %1389 = vmatpush1.msra.mxu0 0.0
  %1390 = vmatprep.subr.mxu0 0.0
  %1391 = vmatpush1.msra.mxu0 0.0
  %1392 = vmatprep.subr.mxu0 0.0
  %1393 = vmatpush1.msra.mxu0 0.0
  %1394 = vmatprep.subr.mxu0 0.0
  %1395 = vmatpush1.msra.mxu0 %v1166
  %1396 = vmatprep.subr.mxu0 0.0
  %1397 = vmatpush1.msra.mxu0 %v1165
  %1398 = vmatprep.subr.mxu0 0.0
  %1399 = vmatpush1.msra.mxu0 %v1164
  %1400 = vmatprep.subr.mxu0 0.0
  %1401 = vmatpush1.msra.mxu0 %v1163
  %1402 = vmatprep.subr.mxu0 0.0
  %1403 = vmatpush2.msra.mxu0 0.0
  %1404 = vmatprep.subr.mxu0 0.0
  %1405 = vmatpush2.msra.mxu0 0.0
  %1406 = vmatprep.subr.mxu0 0.0
  %1407 = vmatpush2.msra.mxu0 0.0
  %1408 = vmatprep.subr.mxu0 0.0
  %1409 = vmatpush2.msra.mxu0 0.0
  %1410 = vmatprep.subr.mxu0 0.0
  %1411 = vmatpush2.msra.mxu0 0.0
  %1412 = vmatprep.subr.mxu0 0.0
  %1413 = vmatpush2.msra.mxu0 0.0
  %1414 = vmatprep.subr.mxu0 0.0
  %1415 = vmatpush2.msra.mxu0 0.0
  %1416 = vmatprep.subr.mxu0 0.0
  %1417 = vmatpush2.msra.mxu0 0.0
  %1418 = vmatprep.subr.mxu0 0.0
  %1419 = vmatpush2.msra.mxu0 0.0
  %1420 = vmatprep.subr.mxu0 0.0
  %1421 = vmatpush2.msra.mxu0 0.0
  %1422 = vmatprep.subr.mxu0 0.0
  %1423 = vmatpush2.msra.mxu0 0.0
  %1424 = vmatprep.subr.mxu0 0.0
  %1425 = vmatpush2.msra.mxu0 0.0
  %1426 = vmatprep.subr.mxu0 0.0
  %1427 = vmatpush2.msra.mxu0 0.0
  %1428 = vmatprep.subr.mxu0 0.0
  %1429 = vmatpush2.msra.mxu0 0.0
  %1430 = vmatprep.subr.mxu0 0.0
  %1431 = vmatpush2.msra.mxu0 0.0
  %1432 = vmatprep.subr.mxu0 0.0
  %1433 = vmatpush2.msra.mxu0 0.0
  %1434 = vmatprep.mubr.f32.mxu0 0.0
  %1435 = vmatmul.mubr.f32.gmra.mxu0 %v1368
  %v1436 = vpop.f32.mrf.mxu0
  %v1437 = vadd.f32 0.0, %v1436
  %v1438 = vpop.f32.mrf.mxu0
  %1439 = vdwg.mxu0
  %v1440 = vadd.f32 %v1367, %v1437
  %v1441 = vmul.f32 %v1440, %v37
  %v1442 = vtanh.pop %v1441
  %v1443 = vadd.f32 %v1442, 1.0
  %v1444 = vmul.f32 %v1443, 0.5
  %v1445 = vsel %vm36, %v1442, %v1444
  %v1446 = vmul.f32 %v1445, %v1355
  %1448 = vrot.lane.b32.xlu0 %v1445, 64
  %v1449 = vpop.permute.xlu0 %1448
  %v1451 = vmul.f32 %v1445, %v1449
  %1453 = vrot.lane.b32.xlu0 %v1451, 32
  %v1454 = vpop.permute.xlu0 %1453
  %v1456 = vadd.f32 %v1446, %v1454
  %v1457 = vtanh.pop %v1456
  %1459 = vrot.lane.b32.xlu0 %v1457, 64
  %v1460 = vpop.permute.xlu0 %1459
  %v1462 = vmul.f32 %v1445, %v1460
  %1464 = vrot.lane.b32.xlu0 %v1462, 32
  %v1465 = vpop.permute.xlu0 %1464
  %1467 = vst.msk [vmem:[#allocation3 + $0x10] sm:$0xff] %vm198, %v1465
  %v1468 = vld [vmem:[#allocation2 + $0x18] sm:$0xff]
  %v1469 = vsel %vm198, %v1465, 0
  %1471 = vmatprep.subr.mxu0 0.0
  %1472 = vmatpush1.msra.mxu0 0.0
  %1473 = vmatprep.subr.mxu0 0.0
  %1474 = vmatpush1.msra.mxu0 0.0
  %1475 = vmatprep.subr.mxu0 0.0
  %1476 = vmatpush1.msra.mxu0 0.0
  %1477 = vmatprep.subr.mxu0 0.0
  %1478 = vmatpush1.msra.mxu0 0.0
  %1479 = vmatprep.subr.mxu0 0.0
  %1480 = vmatpush1.msra.mxu0 0.0
  %1481 = vmatprep.subr.mxu0 0.0
  %1482 = vmatpush1.msra.mxu0 0.0
  %1483 = vmatprep.subr.mxu0 0.0
  %1484 = vmatpush1.msra.mxu0 0.0
  %1485 = vmatprep.subr.mxu0 0.0
  %1486 = vmatpush1.msra.mxu0 0.0
  %1487 = vmatprep.subr.mxu0 0.0
  %1488 = vmatpush1.msra.mxu0 0.0
  %1489 = vmatprep.subr.mxu0 0.0
  %1490 = vmatpush1.msra.mxu0 0.0
  %1491 = vmatprep.subr.mxu0 0.0
  %1492 = vmatpush1.msra.mxu0 0.0
  %1493 = vmatprep.subr.mxu0 0.0
  %1494 = vmatpush1.msra.mxu0 0.0
  %1495 = vmatprep.subr.mxu0 0.0
  %1496 = vmatpush1.msra.mxu0 %v1166
  %1497 = vmatprep.subr.mxu0 0.0
  %1498 = vmatpush1.msra.mxu0 %v1165
  %1499 = vmatprep.subr.mxu0 0.0
  %1500 = vmatpush1.msra.mxu0 %v1164
  %1501 = vmatprep.subr.mxu0 0.0
  %1502 = vmatpush1.msra.mxu0 %v1163
  %1503 = vmatprep.subr.mxu0 0.0
  %1504 = vmatpush2.msra.mxu0 0.0
  %1505 = vmatprep.subr.mxu0 0.0
  %1506 = vmatpush2.msra.mxu0 0.0
  %1507 = vmatprep.subr.mxu0 0.0
  %1508 = vmatpush2.msra.mxu0 0.0
  %1509 = vmatprep.subr.mxu0 0.0
  %1510 = vmatpush2.msra.mxu0 0.0
  %1511 = vmatprep.subr.mxu0 0.0
  %1512 = vmatpush2.msra.mxu0 0.0
  %1513 = vmatprep.subr.mxu0 0.0
  %1514 = vmatpush2.msra.mxu0 0.0
  %1515 = vmatprep.subr.mxu0 0.0
  %1516 = vmatpush2.msra.mxu0 0.0
  %1517 = vmatprep.subr.mxu0 0.0
  %1518 = vmatpush2.msra.mxu0 0.0
  %1519 = vmatprep.subr.mxu0 0.0
  %1520 = vmatpush2.msra.mxu0 0.0
  %1521 = vmatprep.subr.mxu0 0.0
  %1522 = vmatpush2.msra.mxu0 0.0
  %1523 = vmatprep.subr.mxu0 0.0
  %1524 = vmatpush2.msra.mxu0 0.0
  %1525 = vmatprep.subr.mxu0 0.0
  %1526 = vmatpush2.msra.mxu0 0.0
  %1527 = vmatprep.subr.mxu0 0.0
  %1528 = vmatpush2.msra.mxu0 0.0
  %1529 = vmatprep.subr.mxu0 0.0
  %1530 = vmatpush2.msra.mxu0 0.0
  %1531 = vmatprep.subr.mxu0 0.0
  %1532 = vmatpush2.msra.mxu0 0.0
  %1533 = vmatprep.subr.mxu0 0.0
  %1534 = vmatpush2.msra.mxu0 0.0
  %1535 = vmatprep.mubr.f32.mxu0 0.0
  %1536 = vmatmul.mubr.f32.gmra.mxu0 %v1469
  %v1537 = vpop.f32.mrf.mxu0
  %v1538 = vadd.f32 0.0, %v1537
  %v1539 = vpop.f32.mrf.mxu0
  %1540 = vdwg.mxu0
  %v1541 = vadd.f32 %v1468, %v1538
  %v1542 = vmul.f32 %v1541, %v37
  %v1543 = vtanh.pop %v1542
  %v1544 = vadd.f32 %v1543, 1.0
  %v1545 = vmul.f32 %v1544, 0.5
  %v1546 = vsel %vm36, %v1543, %v1545
  %v1547 = vmul.f32 %v1546, %v1456
  %1549 = vrot.lane.b32.xlu0 %v1546, 64
  %v1550 = vpop.permute.xlu0 %1549
  %v1552 = vmul.f32 %v1546, %v1550
  %1554 = vrot.lane.b32.xlu0 %v1552, 32
  %v1555 = vpop.permute.xlu0 %1554
  %v1557 = vadd.f32 %v1547, %v1555
  %v1558 = vtanh.pop %v1557
  %1560 = vrot.lane.b32.xlu0 %v1558, 64
  %v1561 = vpop.permute.xlu0 %1560
  %v1563 = vmul.f32 %v1546, %v1561
  %1565 = vrot.lane.b32.xlu0 %v1563, 32
  %v1566 = vpop.permute.xlu0 %1565
  %1568 = vst.msk [vmem:[#allocation3 + $0x18] sm:$0xff] %vm198, %v1566
  %v1569 = vld [vmem:[#allocation2 + $0x20] sm:$0xff]
  %v1570 = vsel %vm198, %v1566, 0
  %1572 = vmatprep.subr.mxu0 0.0
  %1573 = vmatpush1.msra.mxu0 0.0
  %1574 = vmatprep.subr.mxu0 0.0
  %1575 = vmatpush1.msra.mxu0 0.0
  %1576 = vmatprep.subr.mxu0 0.0
  %1577 = vmatpush1.msra.mxu0 0.0
  %1578 = vmatprep.subr.mxu0 0.0
  %1579 = vmatpush1.msra.mxu0 0.0
  %1580 = vmatprep.subr.mxu0 0.0
  %1581 = vmatpush1.msra.mxu0 0.0
  %1582 = vmatprep.subr.mxu0 0.0
  %1583 = vmatpush1.msra.mxu0 0.0
  %1584 = vmatprep.subr.mxu0 0.0
  %1585 = vmatpush1.msra.mxu0 0.0
  %1586 = vmatprep.subr.mxu0 0.0
  %1587 = vmatpush1.msra.mxu0 0.0
  %1588 = vmatprep.subr.mxu0 0.0
  %1589 = vmatpush1.msra.mxu0 0.0
  %1590 = vmatprep.subr.mxu0 0.0
  %1591 = vmatpush1.msra.mxu0 0.0
  %1592 = vmatprep.subr.mxu0 0.0
  %1593 = vmatpush1.msra.mxu0 0.0
  %1594 = vmatprep.subr.mxu0 0.0
  %1595 = vmatpush1.msra.mxu0 0.0
  %1596 = vmatprep.subr.mxu0 0.0
  %1597 = vmatpush1.msra.mxu0 %v1166
  %1598 = vmatprep.subr.mxu0 0.0
  %1599 = vmatpush1.msra.mxu0 %v1165
  %1600 = vmatprep.subr.mxu0 0.0
  %1601 = vmatpush1.msra.mxu0 %v1164
  %1602 = vmatprep.subr.mxu0 0.0
  %1603 = vmatpush1.msra.mxu0 %v1163
  %1604 = vmatprep.subr.mxu0 0.0
  %1605 = vmatpush2.msra.mxu0 0.0
  %1606 = vmatprep.subr.mxu0 0.0
  %1607 = vmatpush2.msra.mxu0 0.0
  %1608 = vmatprep.subr.mxu0 0.0
  %1609 = vmatpush2.msra.mxu0 0.0
  %1610 = vmatprep.subr.mxu0 0.0
  %1611 = vmatpush2.msra.mxu0 0.0
  %1612 = vmatprep.subr.mxu0 0.0
  %1613 = vmatpush2.msra.mxu0 0.0
  %1614 = vmatprep.subr.mxu0 0.0
  %1615 = vmatpush2.msra.mxu0 0.0
  %1616 = vmatprep.subr.mxu0 0.0
  %1617 = vmatpush2.msra.mxu0 0.0
  %1618 = vmatprep.subr.mxu0 0.0
  %1619 = vmatpush2.msra.mxu0 0.0
  %1620 = vmatprep.subr.mxu0 0.0
  %1621 = vmatpush2.msra.mxu0 0.0
  %1622 = vmatprep.subr.mxu0 0.0
  %1623 = vmatpush2.msra.mxu0 0.0
  %1624 = vmatprep.subr.mxu0 0.0
  %1625 = vmatpush2.msra.mxu0 0.0
  %1626 = vmatprep.subr.mxu0 0.0
  %1627 = vmatpush2.msra.mxu0 0.0
  %1628 = vmatprep.subr.mxu0 0.0
  %1629 = vmatpush2.msra.mxu0 0.0
  %1630 = vmatprep.subr.mxu0 0.0
  %1631 = vmatpush2.msra.mxu0 0.0
  %1632 = vmatprep.subr.mxu0 0.0
  %1633 = vmatpush2.msra.mxu0 0.0
  %1634 = vmatprep.subr.mxu0 0.0
  %1635 = vmatpush2.msra.mxu0 0.0
  %1636 = vmatprep.mubr.f32.mxu0 0.0
  %1637 = vmatmul.mubr.f32.gmra.mxu0 %v1570
  %v1638 = vpop.f32.mrf.mxu0
  %v1639 = vadd.f32 0.0, %v1638
  %v1640 = vpop.f32.mrf.mxu0
  %1641 = vdwg.mxu0
  %v1642 = vadd.f32 %v1569, %v1639
  %v1643 = vmul.f32 %v1642, %v37
  %v1644 = vtanh.pop %v1643
  %v1645 = vadd.f32 %v1644, 1.0
  %v1646 = vmul.f32 %v1645, 0.5
  %v1647 = vsel %vm36, %v1644, %v1646
  %v1648 = vmul.f32 %v1647, %v1557
  %1650 = vrot.lane.b32.xlu0 %v1647, 64
  %v1651 = vpop.permute.xlu0 %1650
  %v1653 = vmul.f32 %v1647, %v1651
  %1655 = vrot.lane.b32.xlu0 %v1653, 32
  %v1656 = vpop.permute.xlu0 %1655
  %v1658 = vadd.f32 %v1648, %v1656
  %v1659 = vtanh.pop %v1658
  %1661 = vrot.lane.b32.xlu0 %v1659, 64
  %v1662 = vpop.permute.xlu0 %1661
  %v1664 = vmul.f32 %v1647, %v1662
  %1666 = vrot.lane.b32.xlu0 %v1664, 32
  %v1667 = vpop.permute.xlu0 %1666
  %1669 = vst.msk [vmem:[#allocation3 + $0x20] sm:$0xff] %vm198, %v1667
  %v1670 = vld [vmem:[#allocation2 + $0x28] sm:$0xff]
  %v1671 = vsel %vm198, %v1667, 0
  %1673 = vmatprep.subr.mxu0 0.0
  %1674 = vmatpush1.msra.mxu0 0.0
  %1675 = vmatprep.subr.mxu0 0.0
  %1676 = vmatpush1.msra.mxu0 0.0
  %1677 = vmatprep.subr.mxu0 0.0
  %1678 = vmatpush1.msra.mxu0 0.0
  %1679 = vmatprep.subr.mxu0 0.0
  %1680 = vmatpush1.msra.mxu0 0.0
  %1681 = vmatprep.subr.mxu0 0.0
  %1682 = vmatpush1.msra.mxu0 0.0
  %1683 = vmatprep.subr.mxu0 0.0
  %1684 = vmatpush1.msra.mxu0 0.0
  %1685 = vmatprep.subr.mxu0 0.0
  %1686 = vmatpush1.msra.mxu0 0.0
  %1687 = vmatprep.subr.mxu0 0.0
  %1688 = vmatpush1.msra.mxu0 0.0
  %1689 = vmatprep.subr.mxu0 0.0
  %1690 = vmatpush1.msra.mxu0 0.0
  %1691 = vmatprep.subr.mxu0 0.0
  %1692 = vmatpush1.msra.mxu0 0.0
  %1693 = vmatprep.subr.mxu0 0.0
  %1694 = vmatpush1.msra.mxu0 0.0
  %1695 = vmatprep.subr.mxu0 0.0
  %1696 = vmatpush1.msra.mxu0 0.0
  %1697 = vmatprep.subr.mxu0 0.0
  %1698 = vmatpush1.msra.mxu0 %v1166
  %1699 = vmatprep.subr.mxu0 0.0
  %1700 = vmatpush1.msra.mxu0 %v1165
  %1701 = vmatprep.subr.mxu0 0.0
  %1702 = vmatpush1.msra.mxu0 %v1164
  %1703 = vmatprep.subr.mxu0 0.0
  %1704 = vmatpush1.msra.mxu0 %v1163
  %1705 = vmatprep.subr.mxu0 0.0
  %1706 = vmatpush2.msra.mxu0 0.0
  %1707 = vmatprep.subr.mxu0 0.0
  %1708 = vmatpush2.msra.mxu0 0.0
  %1709 = vmatprep.subr.mxu0 0.0
  %1710 = vmatpush2.msra.mxu0 0.0
  %1711 = vmatprep.subr.mxu0 0.0
  %1712 = vmatpush2.msra.mxu0 0.0
  %1713 = vmatprep.subr.mxu0 0.0
  %1714 = vmatpush2.msra.mxu0 0.0
  %1715 = vmatprep.subr.mxu0 0.0
  %1716 = vmatpush2.msra.mxu0 0.0
  %1717 = vmatprep.subr.mxu0 0.0
  %1718 = vmatpush2.msra.mxu0 0.0
  %1719 = vmatprep.subr.mxu0 0.0
  %1720 = vmatpush2.msra.mxu0 0.0
  %1721 = vmatprep.subr.mxu0 0.0
  %1722 = vmatpush2.msra.mxu0 0.0
  %1723 = vmatprep.subr.mxu0 0.0
  %1724 = vmatpush2.msra.mxu0 0.0
  %1725 = vmatprep.subr.mxu0 0.0
  %1726 = vmatpush2.msra.mxu0 0.0
  %1727 = vmatprep.subr.mxu0 0.0
  %1728 = vmatpush2.msra.mxu0 0.0
  %1729 = vmatprep.subr.mxu0 0.0
  %1730 = vmatpush2.msra.mxu0 0.0
  %1731 = vmatprep.subr.mxu0 0.0
  %1732 = vmatpush2.msra.mxu0 0.0
  %1733 = vmatprep.subr.mxu0 0.0
  %1734 = vmatpush2.msra.mxu0 0.0
  %1735 = vmatprep.subr.mxu0 0.0
  %1736 = vmatpush2.msra.mxu0 0.0
  %1737 = vmatprep.mubr.f32.mxu0 0.0
  %1738 = vmatmul.mubr.f32.gmra.mxu0 %v1671
  %v1739 = vpop.f32.mrf.mxu0
  %v1740 = vadd.f32 0.0, %v1739
  %v1741 = vpop.f32.mrf.mxu0
  %1742 = vdwg.mxu0
  %v1743 = vadd.f32 %v1670, %v1740
  %v1744 = vmul.f32 %v1743, %v37
  %v1745 = vtanh.pop %v1744
  %v1746 = vadd.f32 %v1745, 1.0
  %v1747 = vmul.f32 %v1746, 0.5
  %v1748 = vsel %vm36, %v1745, %v1747
  %v1749 = vmul.f32 %v1748, %v1658
  %1751 = vrot.lane.b32.xlu0 %v1748, 64
  %v1752 = vpop.permute.xlu0 %1751
  %v1754 = vmul.f32 %v1748, %v1752
  %1756 = vrot.lane.b32.xlu0 %v1754, 32
  %v1757 = vpop.permute.xlu0 %1756
  %v1759 = vadd.f32 %v1749, %v1757
  %v1760 = vtanh.pop %v1759
  %1762 = vrot.lane.b32.xlu0 %v1760, 64
  %v1763 = vpop.permute.xlu0 %1762
  %v1765 = vmul.f32 %v1748, %v1763
  %1767 = vrot.lane.b32.xlu0 %v1765, 32
  %v1768 = vpop.permute.xlu0 %1767
  %1770 = vst.msk [vmem:[#allocation3 + $0x28] sm:$0xff] %vm198, %v1768
  %v1771 = vld [vmem:[#allocation2 + $0x30] sm:$0xff]
  %v1772 = vsel %vm198, %v1768, 0
  %1774 = vmatprep.subr.mxu0 0.0
  %1775 = vmatpush1.msra.mxu0 0.0
  %1776 = vmatprep.subr.mxu0 0.0
  %1777 = vmatpush1.msra.mxu0 0.0
  %1778 = vmatprep.subr.mxu0 0.0
  %1779 = vmatpush1.msra.mxu0 0.0
  %1780 = vmatprep.subr.mxu0 0.0
  %1781 = vmatpush1.msra.mxu0 0.0
  %1782 = vmatprep.subr.mxu0 0.0
  %1783 = vmatpush1.msra.mxu0 0.0
  %1784 = vmatprep.subr.mxu0 0.0
  %1785 = vmatpush1.msra.mxu0 0.0
  %1786 = vmatprep.subr.mxu0 0.0
  %1787 = vmatpush1.msra.mxu0 0.0
  %1788 = vmatprep.subr.mxu0 0.0
  %1789 = vmatpush1.msra.mxu0 0.0
  %1790 = vmatprep.subr.mxu0 0.0
  %1791 = vmatpush1.msra.mxu0 0.0
  %1792 = vmatprep.subr.mxu0 0.0
  %1793 = vmatpush1.msra.mxu0 0.0
  %1794 = vmatprep.subr.mxu0 0.0
  %1795 = vmatpush1.msra.mxu0 0.0
  %1796 = vmatprep.subr.mxu0 0.0
  %1797 = vmatpush1.msra.mxu0 0.0
  %1798 = vmatprep.subr.mxu0 0.0
  %1799 = vmatpush1.msra.mxu0 %v1166
  %1800 = vmatprep.subr.mxu0 0.0
  %1801 = vmatpush1.msra.mxu0 %v1165
  %1802 = vmatprep.subr.mxu0 0.0
  %1803 = vmatpush1.msra.mxu0 %v1164
  %1804 = vmatprep.subr.mxu0 0.0
  %1805 = vmatpush1.msra.mxu0 %v1163
  %1806 = vmatprep.subr.mxu0 0.0
  %1807 = vmatpush2.msra.mxu0 0.0
  %1808 = vmatprep.subr.mxu0 0.0
  %1809 = vmatpush2.msra.mxu0 0.0
  %1810 = vmatprep.subr.mxu0 0.0
  %1811 = vmatpush2.msra.mxu0 0.0
  %1812 = vmatprep.subr.mxu0 0.0
  %1813 = vmatpush2.msra.mxu0 0.0
  %1814 = vmatprep.subr.mxu0 0.0
  %1815 = vmatpush2.msra.mxu0 0.0
  %1816 = vmatprep.subr.mxu0 0.0
  %1817 = vmatpush2.msra.mxu0 0.0
  %1818 = vmatprep.subr.mxu0 0.0
  %1819 = vmatpush2.msra.mxu0 0.0
  %1820 = vmatprep.subr.mxu0 0.0
  %1821 = vmatpush2.msra.mxu0 0.0
  %1822 = vmatprep.subr.mxu0 0.0
  %1823 = vmatpush2.msra.mxu0 0.0
  %1824 = vmatprep.subr.mxu0 0.0
  %1825 = vmatpush2.msra.mxu0 0.0
  %1826 = vmatprep.subr.mxu0 0.0
  %1827 = vmatpush2.msra.mxu0 0.0
  %1828 = vmatprep.subr.mxu0 0.0
  %1829 = vmatpush2.msra.mxu0 0.0
  %1830 = vmatprep.subr.mxu0 0.0
  %1831 = vmatpush2.msra.mxu0 0.0
  %1832 = vmatprep.subr.mxu0 0.0
  %1833 = vmatpush2.msra.mxu0 0.0
  %1834 = vmatprep.subr.mxu0 0.0
  %1835 = vmatpush2.msra.mxu0 0.0
  %1836 = vmatprep.subr.mxu0 0.0
  %1837 = vmatpush2.msra.mxu0 0.0
  %1838 = vmatprep.mubr.f32.mxu0 0.0
  %1839 = vmatmul.mubr.f32.gmra.mxu0 %v1772
  %v1840 = vpop.f32.mrf.mxu0
  %v1841 = vadd.f32 0.0, %v1840
  %v1842 = vpop.f32.mrf.mxu0
  %1843 = vdwg.mxu0
  %v1844 = vadd.f32 %v1771, %v1841
  %v1845 = vmul.f32 %v1844, %v37
  %v1846 = vtanh.pop %v1845
  %v1847 = vadd.f32 %v1846, 1.0
  %v1848 = vmul.f32 %v1847, 0.5
  %v1849 = vsel %vm36, %v1846, %v1848
  %v1850 = vmul.f32 %v1849, %v1759
  %1852 = vrot.lane.b32.xlu0 %v1849, 64
  %v1853 = vpop.permute.xlu0 %1852
  %v1855 = vmul.f32 %v1849, %v1853
  %1857 = vrot.lane.b32.xlu0 %v1855, 32
  %v1858 = vpop.permute.xlu0 %1857
  %v1860 = vadd.f32 %v1850, %v1858
  %v1861 = vtanh.pop %v1860
  %1863 = vrot.lane.b32.xlu0 %v1861, 64
  %v1864 = vpop.permute.xlu0 %1863
  %v1866 = vmul.f32 %v1849, %v1864
  %1868 = vrot.lane.b32.xlu0 %v1866, 32
  %v1869 = vpop.permute.xlu0 %1868
  %1871 = vst.msk [vmem:[#allocation3 + $0x30] sm:$0xff] %vm198, %v1869
  %v1872 = vld [vmem:[#allocation2 + $0x38] sm:$0xff]
  %v1873 = vsel %vm198, %v1869, 0
  %1875 = vmatprep.subr.mxu0 0.0
  %1876 = vmatpush1.msra.mxu0 0.0
  %1877 = vmatprep.subr.mxu0 0.0
  %1878 = vmatpush1.msra.mxu0 0.0
  %1879 = vmatprep.subr.mxu0 0.0
  %1880 = vmatpush1.msra.mxu0 0.0
  %1881 = vmatprep.subr.mxu0 0.0
  %1882 = vmatpush1.msra.mxu0 0.0
  %1883 = vmatprep.subr.mxu0 0.0
  %1884 = vmatpush1.msra.mxu0 0.0
  %1885 = vmatprep.subr.mxu0 0.0
  %1886 = vmatpush1.msra.mxu0 0.0
  %1887 = vmatprep.subr.mxu0 0.0
  %1888 = vmatpush1.msra.mxu0 0.0
  %1889 = vmatprep.subr.mxu0 0.0
  %1890 = vmatpush1.msra.mxu0 0.0
  %1891 = vmatprep.subr.mxu0 0.0
  %1892 = vmatpush1.msra.mxu0 0.0
  %1893 = vmatprep.subr.mxu0 0.0
  %1894 = vmatpush1.msra.mxu0 0.0
  %1895 = vmatprep.subr.mxu0 0.0
  %1896 = vmatpush1.msra.mxu0 0.0
  %1897 = vmatprep.subr.mxu0 0.0
  %1898 = vmatpush1.msra.mxu0 0.0
  %1899 = vmatprep.subr.mxu0 0.0
  %1900 = vmatpush1.msra.mxu0 %v1166
  %1901 = vmatprep.subr.mxu0 0.0
  %1902 = vmatpush1.msra.mxu0 %v1165
  %1903 = vmatprep.subr.mxu0 0.0
  %1904 = vmatpush1.msra.mxu0 %v1164
  %1905 = vmatprep.subr.mxu0 0.0
  %1906 = vmatpush1.msra.mxu0 %v1163
  %1907 = vmatprep.subr.mxu0 0.0
  %1908 = vmatpush2.msra.mxu0 0.0
  %1909 = vmatprep.subr.mxu0 0.0
  %1910 = vmatpush2.msra.mxu0 0.0
  %1911 = vmatprep.subr.mxu0 0.0
  %1912 = vmatpush2.msra.mxu0 0.0
  %1913 = vmatprep.subr.mxu0 0.0
  %1914 = vmatpush2.msra.mxu0 0.0
  %1915 = vmatprep.subr.mxu0 0.0
  %1916 = vmatpush2.msra.mxu0 0.0
  %1917 = vmatprep.subr.mxu0 0.0
  %1918 = vmatpush2.msra.mxu0 0.0
  %1919 = vmatprep.subr.mxu0 0.0
  %1920 = vmatpush2.msra.mxu0 0.0
  %1921 = vmatprep.subr.mxu0 0.0
  %1922 = vmatpush2.msra.mxu0 0.0
  %1923 = vmatprep.subr.mxu0 0.0
  %1924 = vmatpush2.msra.mxu0 0.0
  %1925 = vmatprep.subr.mxu0 0.0
  %1926 = vmatpush2.msra.mxu0 0.0
  %1927 = vmatprep.subr.mxu0 0.0
  %1928 = vmatpush2.msra.mxu0 0.0
  %1929 = vmatprep.subr.mxu0 0.0
  %1930 = vmatpush2.msra.mxu0 0.0
  %1931 = vmatprep.subr.mxu0 0.0
  %1932 = vmatpush2.msra.mxu0 0.0
  %1933 = vmatprep.subr.mxu0 0.0
  %1934 = vmatpush2.msra.mxu0 0.0
  %1935 = vmatprep.subr.mxu0 0.0
  %1936 = vmatpush2.msra.mxu0 0.0
  %1937 = vmatprep.subr.mxu0 0.0
  %1938 = vmatpush2.msra.mxu0 0.0
  %1939 = vmatprep.mubr.f32.mxu0 0.0
  %1940 = vmatmul.mubr.f32.gmra.mxu0 %v1873
  %v1941 = vpop.f32.mrf.mxu0
  %v1942 = vadd.f32 0.0, %v1941
  %v1943 = vpop.f32.mrf.mxu0
  %1944 = vdwg.mxu0
  %v1945 = vadd.f32 %v1872, %v1942
  %v1946 = vmul.f32 %v1945, %v37
  %v1947 = vtanh.pop %v1946
  %v1948 = vadd.f32 %v1947, 1.0
  %v1949 = vmul.f32 %v1948, 0.5
  %v1950 = vsel %vm36, %v1947, %v1949
  %v1951 = vmul.f32 %v1950, %v1860
  %1953 = vrot.lane.b32.xlu0 %v1950, 64
  %v1954 = vpop.permute.xlu0 %1953
  %v1956 = vmul.f32 %v1950, %v1954
  %1958 = vrot.lane.b32.xlu0 %v1956, 32
  %v1959 = vpop.permute.xlu0 %1958
  %v1961 = vadd.f32 %v1951, %v1959
  %v1962 = vtanh.pop %v1961
  %1964 = vrot.lane.b32.xlu0 %v1962, 64
  %v1965 = vpop.permute.xlu0 %1964
  %v1967 = vmul.f32 %v1950, %v1965
  %1969 = vrot.lane.b32.xlu0 %v1967, 32
  %v1970 = vpop.permute.xlu0 %1969
  %1972 = vst.msk [vmem:[#allocation3 + $0x38] sm:$0xff] %vm198, %v1970
  %v1973 = vld [vmem:[#allocation3 + $0x38] sm:$0xff]
  %vm1974 = vcmp.gt.f32.partialorder %v1973, 0.0
  %v1975 = vmul.f32 %v1973, 1.442695
  %v1976 = vpow.pop %v1975
  %v1977 = vsub.f32 %v1976, 1.0
  %v1978 = vsel %vm1974, %v1973, %v1977
  %v1979 = vld [vmem:[%s7] sm:$0xff]
  %v1980 = vld [vmem:[%s7 + $0x8] sm:$0xff]
  %v1981 = vld [vmem:[%s7 + $0x10] sm:$0xff]
  %v1982 = vld [vmem:[%s7 + $0x18] sm:$0xff]
  %v1983 = vld [vmem:[%s8] sm:$0x1]
  %v1985 = vlaneseq
  %v1986 = vshrl.u32 %v1985, 7
  %v1987 = vsub.s32 0, %v1986
  %v1988 = vrot.slane %v1983, %v1987
  %v1991 = vsel %vm198, %v1978, 0
  %1993 = vmatprep.subr.mxu0 0.0
  %1994 = vmatpush1.msra.mxu0 0.0
  %1995 = vmatprep.subr.mxu0 0.0
  %1996 = vmatpush1.msra.mxu0 0.0
  %1997 = vmatprep.subr.mxu0 0.0
  %1998 = vmatpush1.msra.mxu0 0.0
  %1999 = vmatprep.subr.mxu0 0.0
  %2000 = vmatpush1.msra.mxu0 0.0
  %2001 = vmatprep.subr.mxu0 0.0
  %2002 = vmatpush1.msra.mxu0 0.0
  %2003 = vmatprep.subr.mxu0 0.0
  %2004 = vmatpush1.msra.mxu0 0.0
  %2005 = vmatprep.subr.mxu0 0.0
  %2006 = vmatpush1.msra.mxu0 0.0
  %2007 = vmatprep.subr.mxu0 0.0
  %2008 = vmatpush1.msra.mxu0 0.0
  %2009 = vmatprep.subr.mxu0 0.0
  %2010 = vmatpush1.msra.mxu0 0.0
  %2011 = vmatprep.subr.mxu0 0.0
  %2012 = vmatpush1.msra.mxu0 0.0
  %2013 = vmatprep.subr.mxu0 0.0
  %2014 = vmatpush1.msra.mxu0 0.0
  %2015 = vmatprep.subr.mxu0 0.0
  %2016 = vmatpush1.msra.mxu0 0.0
  %2017 = vmatprep.subr.mxu0 0.0
  %2018 = vmatpush1.msra.mxu0 %v1982
  %2019 = vmatprep.subr.mxu0 0.0
  %2020 = vmatpush1.msra.mxu0 %v1981
  %2021 = vmatprep.subr.mxu0 0.0
  %2022 = vmatpush1.msra.mxu0 %v1980
  %2023 = vmatprep.subr.mxu0 0.0
  %2024 = vmatpush1.msra.mxu0 %v1979
  %2025 = vmatprep.subr.mxu0 0.0
  %2026 = vmatpush2.msra.mxu0 0.0
  %2027 = vmatprep.subr.mxu0 0.0
  %2028 = vmatpush2.msra.mxu0 0.0
  %2029 = vmatprep.subr.mxu0 0.0
  %2030 = vmatpush2.msra.mxu0 0.0
  %2031 = vmatprep.subr.mxu0 0.0
  %2032 = vmatpush2.msra.mxu0 0.0
  %2033 = vmatprep.subr.mxu0 0.0
  %2034 = vmatpush2.msra.mxu0 0.0
  %2035 = vmatprep.subr.mxu0 0.0
  %2036 = vmatpush2.msra.mxu0 0.0
  %2037 = vmatprep.subr.mxu0 0.0
  %2038 = vmatpush2.msra.mxu0 0.0
  %2039 = vmatprep.subr.mxu0 0.0
  %2040 = vmatpush2.msra.mxu0 0.0
  %2041 = vmatprep.subr.mxu0 0.0
  %2042 = vmatpush2.msra.mxu0 0.0
  %2043 = vmatprep.subr.mxu0 0.0
  %2044 = vmatpush2.msra.mxu0 0.0
  %2045 = vmatprep.subr.mxu0 0.0
  %2046 = vmatpush2.msra.mxu0 0.0
  %2047 = vmatprep.subr.mxu0 0.0
  %2048 = vmatpush2.msra.mxu0 0.0
  %2049 = vmatprep.subr.mxu0 0.0
  %2050 = vmatpush2.msra.mxu0 0.0
  %2051 = vmatprep.subr.mxu0 0.0
  %2052 = vmatpush2.msra.mxu0 0.0
  %2053 = vmatprep.subr.mxu0 0.0
  %2054 = vmatpush2.msra.mxu0 0.0
  %2055 = vmatprep.subr.mxu0 0.0
  %2056 = vmatpush2.msra.mxu0 0.0
  %2057 = vmatprep.mubr.f32.mxu0 0.0
  %2058 = vmatmul.mubr.f32.gmra.mxu0 %v1991
  %v2059 = vpop.f32.mrf.mxu0
  %v2060 = vadd.f32 %v1988, %v2059
  %v2061 = vpop.f32.mrf.mxu0
  %2062 = vdwg.mxu0
  %vm2063 = vcmask 31744
  %2064 = vst.msk [vmem:[%s9] sm:$0xff] %vm2063, %v2060
  // Predicated region
  $region38: #{lstm2_forward.1} parent=0 // pred_check
    _
  $region39: #{lstm2_forward.1} parent=0 // pred_check_branch
    %2066 = sbr.rel (0) target = $region41
  $region40: #{lstm2_forward.1} parent=0 // pred_region
    _
  $region41: #{lstm2_forward.1} parent=0 // pred_fallthru
    _
  // Predicated region
  $region42: #{lstm2_forward.1} parent=0 // pred_check
    _
  $region43: #{lstm2_forward.1} parent=0 // pred_check_branch
    %2068 = sbr.rel (0) target = $region45
  $region44: #{lstm2_forward.1} parent=0 // pred_region
    _
  $region45: #{lstm2_forward.1} parent=0 // pred_fallthru
    _

</llo_original>
